<compile_context>
chip_gen: v7x
topology: tpu7x:2x2x1
jax: 0.10.0
libtpu: 0.0.40
codegen_flags: <defaults>
</compile_context>

<pallas_src>
import functools
import numpy as np
import jax
import jax.numpy as jnp
from jax import lax
from jax.experimental import pallas as pl
from jax.experimental.pallas import tpu as pltpu


# --------------------------------- kernel -----------------------------------
def attention_kernel(x_ref, wqkv_ref, mask_ref, wp_ref, bp_ref, o_ref,
                     *, num_heads, n_tok):
    x = x_ref[...]                                        # (B*N, C)
    bn, c = x.shape
    bsz = bn // n_tok

    # Fused, lane-dense QKV projection (scale pre-folded into the Q columns).
    qkv = jnp.dot(x, wqkv_ref[...],
                  preferred_element_type=jnp.float32)     # (B*N, 3C)
    mask = mask_ref[...]                                  # (H*N, C) block-diag head mask

    y_parts = []
    for b in range(bsz):                                  # static unroll (B is tiny)
        r0 = b * n_tok
        q = qkv[r0:r0 + n_tok, 0:c]                       # (N, C) head-concat, pre-scaled
        k = qkv[r0:r0 + n_tok, c:2 * c]                   # (N, C)
        v = qkv[r0:r0 + n_tok, 2 * c:3 * c]               # (N, C)

        # Block-diagonal stacked scores: one 64-deep matmul instead of H 8-deep ones.
        # Q_bd[h*N+n, :] keeps only head h's columns of q[n, :], so
        # S[h*N+n, m] = Q_h[n] . K_h[m].
        q_bd = jnp.concatenate([q] * num_heads, axis=0) * mask           # (H*N, C)
        s = lax.dot_general(q_bd, k, (((1,), (1,)), ((), ())),
                            preferred_element_type=jnp.float32)          # (H*N, N)

        # Single softmax over the key dim for all heads at once.
        m = jnp.max(s, axis=-1, keepdims=True)
        e = jnp.exp(s - m)
        attn = e * pl.reciprocal(jnp.sum(e, axis=-1, keepdims=True), approx=True)

        # attn @ V in one matmul; mask kills the cross-head columns, then a
        # cheap head-fold (columns are disjoint per head) packs O as (N, H*hd).
        ow = jnp.dot(attn, v, preferred_element_type=jnp.float32) * mask  # (H*N, C)
        o = ow[0:n_tok, :]
        for h in range(1, num_heads):
            o = o + ow[h * n_tok:(h + 1) * n_tok, :]
        y_parts.append(o)                                 # (N, C) head-concatenated

    # Single output projection for the whole batch.
    o_all = jnp.concatenate(y_parts, axis=0)              # (B*N, C)
    y = jnp.dot(o_all, wp_ref[...],
                preferred_element_type=jnp.float32) + bp_ref[...]         # (B*N, C)

    # Lane-dense (N, B*C) output slab: batch b occupies columns [b*C, (b+1)*C).
    o_ref[...] = jnp.concatenate(
        [y[b * n_tok:(b + 1) * n_tok, :] for b in range(bsz)], axis=1)


# ------------------------------ pallas wrapper -------------------------------
def attention_forward(x, wqkv, wproj, bproj, *, num_heads):
    """x: (B, N, C); wqkv: (3C, C) torch Linear layout; wproj: (C, C); bproj: (C,)."""
    bsz, n_tok, c = x.shape
    hd = c // num_heads
    scale = hd ** -0.5

    # One-time, wrapper-side weight packing (plain XLA):
    #   Wqkv_packed: (C, 3C) so qkv = x @ Wqkv_packed; scale folded into Q cols.
    #   wp:          (C, C)  = wproj.T   (o_headconcat @ wp + b).
    #   mask:        (H*N, C) block-diagonal head mask, mask[r, col] = (r//N == col//hd).
    x2d = x.reshape(bsz * n_tok, c)
    w_packed = jnp.concatenate([wqkv[:c] * scale, wqkv[c:]], axis=0).T   # (C, 3C)
    wp = wproj.T                                                         # (C, C)
    bp = bproj.reshape(1, c)
    rh = jnp.arange(num_heads * n_tok, dtype=jnp.int32) // n_tok
    ch = jnp.arange(c, dtype=jnp.int32) // hd
    mask = (rh[:, None] == ch[None, :]).astype(jnp.float32)              # (H*N, C)

    def full_spec(shape):
        r = len(shape)
        return pl.BlockSpec(shape, lambda i, _r=r: (0,) * _r)

    kern = functools.partial(attention_kernel, num_heads=num_heads, n_tok=n_tok)
    out = pl.pallas_call(
        kern,
        out_shape=jax.ShapeDtypeStruct((n_tok, bsz * c), jnp.float32),
        grid=(1,),
        in_specs=[full_spec(x2d.shape), full_spec(w_packed.shape),
                  full_spec(mask.shape), full_spec(wp.shape), full_spec(bp.shape)],
        out_specs=full_spec((n_tok, bsz * c)),
        compiler_params=pltpu.CompilerParams(dimension_semantics=("arbitrary",)),
    )(x2d, w_packed, mask, wp, bp)

    # (N, B*C) slab -> (B, N, C)
    return out.reshape(n_tok, bsz, c).transpose(1, 0, 2)


# ------------------------- pure-JAX reference (check) ------------------------
def reference_attention(x, wqkv, wproj, bproj, *, num_heads):
    bsz, n, c = x.shape
    hd = c // num_heads
    qkv = jnp.einsum('bnc,dc->bnd', x, wqkv).reshape(bsz, n, 3, num_heads, hd)
    qkv = qkv.transpose(2, 0, 3, 1, 4)
    q, k, v = qkv[0], qkv[1], qkv[2]
    attn = jax.nn.softmax(jnp.einsum('bhnd,bhmd->bhnm', q, k) * hd ** -0.5, axis=-1)
    o = jnp.einsum('bhnm,bhmd->bhnd', attn, v).transpose(0, 2, 1, 3).reshape(bsz, n, c)
    return jnp.einsum('bnc,dc->bnd', o, wproj) + bproj


# ----------------------------------- main ------------------------------------
if __name__ == "__main__":
    BATCH, N_TOK, EMBED, NUM_HEADS = 2, 17, 64, 8

    root = jax.random.PRNGKey(0)
    k_x, k_qkv, k_proj, k_bias = jax.random.split(root, 4)
    std = EMBED ** -0.5
    x = jax.random.normal(k_x, (BATCH, N_TOK, EMBED), jnp.float32)
    wqkv = std * jax.random.normal(k_qkv, (3 * EMBED, EMBED), jnp.float32)   # (3C, C)
    wproj = std * jax.random.normal(k_proj, (EMBED, EMBED), jnp.float32)     # (C, C)
    bproj = 0.1 * jax.random.normal(k_bias, (EMBED,), jnp.float32)           # (C,)

    out = attention_forward(x, wqkv, wproj, bproj, num_heads=NUM_HEADS)
    out = jax.block_until_ready(out)
    assert out.shape == (BATCH, N_TOK, EMBED)

    with jax.default_matmul_precision('highest'):
        ref = jax.block_until_ready(
            reference_attention(x, wqkv, wproj, bproj, num_heads=NUM_HEADS))
    np.testing.assert_allclose(np.asarray(out), np.asarray(ref),
                               rtol=1e-2, atol=1e-2)
    print("KERNEL_OK")
</pallas_src>

<mosaic_0001>
module attributes {stable_mosaic.version = 11 : i64} {
  func.func @attention_kernel(%arg0: i32, %arg1: memref<34x64xf32, #tpu.memory_space<vmem>>, %arg2: memref<64x192xf32, #tpu.memory_space<vmem>>, %arg3: memref<136x64xf32, #tpu.memory_space<vmem>>, %arg4: memref<64x64xf32, #tpu.memory_space<vmem>>, %arg5: memref<1x64xf32, #tpu.memory_space<vmem>>, %arg6: memref<17x128xf32, #tpu.memory_space<vmem>>) attributes {dimension_semantics = [#tpu.dimension_semantics<arbitrary>], iteration_bounds = array<i64: 1>, scalar_prefetch = 0 : i64, scratch_operands = 0 : i64, tpu.core_type = #tpu.core_type<tc>, window_params = [{pipeline_mode = #tpu.pipeline_mode<synchronous>, transform_indices = @transform_0, window_bounds = array<i64: 34, 64>}, {pipeline_mode = #tpu.pipeline_mode<synchronous>, transform_indices = @transform_1, window_bounds = array<i64: 64, 192>}, {pipeline_mode = #tpu.pipeline_mode<synchronous>, transform_indices = @transform_2, window_bounds = array<i64: 136, 64>}, {pipeline_mode = #tpu.pipeline_mode<synchronous>, transform_indices = @transform_3, window_bounds = array<i64: 64, 64>}, {pipeline_mode = #tpu.pipeline_mode<synchronous>, transform_indices = @transform_4, window_bounds = array<i64: 1, 64>}, {pipeline_mode = #tpu.pipeline_mode<synchronous>, transform_indices = @transform_5, window_bounds = array<i64: 17, 128>}]} {
    %c0 = arith.constant 0 : index
    %c0_0 = arith.constant 0 : index
    %0 = vector.load %arg1[%c0, %c0_0] : memref<34x64xf32, #tpu.memory_space<vmem>>, vector<34x64xf32>
    %c0_1 = arith.constant 0 : index
    %c0_2 = arith.constant 0 : index
    %1 = vector.load %arg2[%c0_1, %c0_2] : memref<64x192xf32, #tpu.memory_space<vmem>>, vector<64x192xf32>
    %cst = arith.constant dense<0.000000e+00> : vector<34x192xf32>
    %2 = tpu.matmul %0, %1, %cst {dimension_numbers = #tpu.dot_dimension_numbers<[1], [0], [0], [1], [0, 0, 1, 1], [], []>} : vector<34x64xf32>, vector<64x192xf32>, vector<34x192xf32> -> vector<34x192xf32>
    %c0_3 = arith.constant 0 : index
    %c0_4 = arith.constant 0 : index
    %3 = vector.load %arg3[%c0_3, %c0_4] : memref<136x64xf32, #tpu.memory_space<vmem>>, vector<136x64xf32>
    %4 = vector.extract_strided_slice %2 {offsets = [0, 0], sizes = [17, 64], strides = [1, 1]} : vector<34x192xf32> to vector<17x64xf32>
    %5 = vector.extract_strided_slice %2 {offsets = [0, 64], sizes = [17, 64], strides = [1, 1]} : vector<34x192xf32> to vector<17x64xf32>
    %6 = vector.extract_strided_slice %2 {offsets = [0, 128], sizes = [17, 64], strides = [1, 1]} : vector<34x192xf32> to vector<17x64xf32>
    %7 = tpu.concatenate %4, %4, %4, %4, %4, %4, %4, %4 in 0 : vector<17x64xf32>, vector<17x64xf32>, vector<17x64xf32>, vector<17x64xf32>, vector<17x64xf32>, vector<17x64xf32>, vector<17x64xf32>, vector<17x64xf32> -> vector<136x64xf32>
    %8 = arith.mulf %7, %3 : vector<136x64xf32>
    %cst_5 = arith.constant dense<0.000000e+00> : vector<136x17xf32>
    %9 = tpu.matmul %8, %5, %cst_5 {dimension_numbers = #tpu.dot_dimension_numbers<[1], [1], [0], [0], [0, 0, 1, 0], [], []>} : vector<136x64xf32>, vector<17x64xf32>, vector<136x17xf32> -> vector<136x17xf32>
    %cst_6 = arith.constant dense<0xFF800000> : vector<136xf32>
    %10 = vector.multi_reduction <maximumf>, %9, %cst_6 [1] : vector<136x17xf32> to vector<136xf32>
    %11 = vector.shape_cast %10 : vector<136xf32> to vector<136x1xf32>
    %12 = vector.broadcast %11 : vector<136x1xf32> to vector<136x17xf32>
    %13 = arith.subf %9, %12 : vector<136x17xf32>
    %14 = math.exp %13 : vector<136x17xf32>
    %cst_7 = arith.constant dense<0.000000e+00> : vector<136xf32>
    %15 = vector.multi_reduction <add>, %14, %cst_7 [1] : vector<136x17xf32> to vector<136xf32>
    %16 = vector.shape_cast %15 : vector<136xf32> to vector<136x1xf32>
    %17 = tpu.reciprocal %16 {approx = true} : vector<136x1xf32> -> vector<136x1xf32>
    %18 = vector.broadcast %17 : vector<136x1xf32> to vector<136x17xf32>
    %19 = arith.mulf %14, %18 : vector<136x17xf32>
    %cst_8 = arith.constant dense<0.000000e+00> : vector<136x64xf32>
    %20 = tpu.matmul %19, %6, %cst_8 {dimension_numbers = #tpu.dot_dimension_numbers<[1], [0], [0], [1], [0, 0, 1, 1], [], []>} : vector<136x17xf32>, vector<17x64xf32>, vector<136x64xf32> -> vector<136x64xf32>
    %21 = arith.mulf %20, %3 : vector<136x64xf32>
    %22 = vector.extract_strided_slice %21 {offsets = [0, 0], sizes = [17, 64], strides = [1, 1]} : vector<136x64xf32> to vector<17x64xf32>
    %23 = vector.extract_strided_slice %21 {offsets = [17, 0], sizes = [17, 64], strides = [1, 1]} : vector<136x64xf32> to vector<17x64xf32>
    %24 = arith.addf %22, %23 : vector<17x64xf32>
    %25 = vector.extract_strided_slice %21 {offsets = [34, 0], sizes = [17, 64], strides = [1, 1]} : vector<136x64xf32> to vector<17x64xf32>
    %26 = arith.addf %24, %25 : vector<17x64xf32>
    %27 = vector.extract_strided_slice %21 {offsets = [51, 0], sizes = [17, 64], strides = [1, 1]} : vector<136x64xf32> to vector<17x64xf32>
    %28 = arith.addf %26, %27 : vector<17x64xf32>
    %29 = vector.extract_strided_slice %21 {offsets = [68, 0], sizes = [17, 64], strides = [1, 1]} : vector<136x64xf32> to vector<17x64xf32>
    %30 = arith.addf %28, %29 : vector<17x64xf32>
    %31 = vector.extract_strided_slice %21 {offsets = [85, 0], sizes = [17, 64], strides = [1, 1]} : vector<136x64xf32> to vector<17x64xf32>
    %32 = arith.addf %30, %31 : vector<17x64xf32>
    %33 = vector.extract_strided_slice %21 {offsets = [102, 0], sizes = [17, 64], strides = [1, 1]} : vector<136x64xf32> to vector<17x64xf32>
    %34 = arith.addf %32, %33 : vector<17x64xf32>
    %35 = vector.extract_strided_slice %21 {offsets = [119, 0], sizes = [17, 64], strides = [1, 1]} : vector<136x64xf32> to vector<17x64xf32>
    %36 = arith.addf %34, %35 : vector<17x64xf32>
    %37 = vector.extract_strided_slice %2 {offsets = [17, 0], sizes = [17, 64], strides = [1, 1]} : vector<34x192xf32> to vector<17x64xf32>
    %38 = vector.extract_strided_slice %2 {offsets = [17, 64], sizes = [17, 64], strides = [1, 1]} : vector<34x192xf32> to vector<17x64xf32>
    %39 = vector.extract_strided_slice %2 {offsets = [17, 128], sizes = [17, 64], strides = [1, 1]} : vector<34x192xf32> to vector<17x64xf32>
    %40 = tpu.concatenate %37, %37, %37, %37, %37, %37, %37, %37 in 0 : vector<17x64xf32>, vector<17x64xf32>, vector<17x64xf32>, vector<17x64xf32>, vector<17x64xf32>, vector<17x64xf32>, vector<17x64xf32>, vector<17x64xf32> -> vector<136x64xf32>
    %41 = arith.mulf %40, %3 : vector<136x64xf32>
    %cst_9 = arith.constant dense<0.000000e+00> : vector<136x17xf32>
    %42 = tpu.matmul %41, %38, %cst_9 {dimension_numbers = #tpu.dot_dimension_numbers<[1], [1], [0], [0], [0, 0, 1, 0], [], []>} : vector<136x64xf32>, vector<17x64xf32>, vector<136x17xf32> -> vector<136x17xf32>
    %cst_10 = arith.constant dense<0xFF800000> : vector<136xf32>
    %43 = vector.multi_reduction <maximumf>, %42, %cst_10 [1] : vector<136x17xf32> to vector<136xf32>
    %44 = vector.shape_cast %43 : vector<136xf32> to vector<136x1xf32>
    %45 = vector.broadcast %44 : vector<136x1xf32> to vector<136x17xf32>
    %46 = arith.subf %42, %45 : vector<136x17xf32>
    %47 = math.exp %46 : vector<136x17xf32>
    %cst_11 = arith.constant dense<0.000000e+00> : vector<136xf32>
    %48 = vector.multi_reduction <add>, %47, %cst_11 [1] : vector<136x17xf32> to vector<136xf32>
    %49 = vector.shape_cast %48 : vector<136xf32> to vector<136x1xf32>
    %50 = tpu.reciprocal %49 {approx = true} : vector<136x1xf32> -> vector<136x1xf32>
    %51 = vector.broadcast %50 : vector<136x1xf32> to vector<136x17xf32>
    %52 = arith.mulf %47, %51 : vector<136x17xf32>
    %cst_12 = arith.constant dense<0.000000e+00> : vector<136x64xf32>
    %53 = tpu.matmul %52, %39, %cst_12 {dimension_numbers = #tpu.dot_dimension_numbers<[1], [0], [0], [1], [0, 0, 1, 1], [], []>} : vector<136x17xf32>, vector<17x64xf32>, vector<136x64xf32> -> vector<136x64xf32>
    %54 = arith.mulf %53, %3 : vector<136x64xf32>
    %55 = vector.extract_strided_slice %54 {offsets = [0, 0], sizes = [17, 64], strides = [1, 1]} : vector<136x64xf32> to vector<17x64xf32>
    %56 = vector.extract_strided_slice %54 {offsets = [17, 0], sizes = [17, 64], strides = [1, 1]} : vector<136x64xf32> to vector<17x64xf32>
    %57 = arith.addf %55, %56 : vector<17x64xf32>
    %58 = vector.extract_strided_slice %54 {offsets = [34, 0], sizes = [17, 64], strides = [1, 1]} : vector<136x64xf32> to vector<17x64xf32>
    %59 = arith.addf %57, %58 : vector<17x64xf32>
    %60 = vector.extract_strided_slice %54 {offsets = [51, 0], sizes = [17, 64], strides = [1, 1]} : vector<136x64xf32> to vector<17x64xf32>
    %61 = arith.addf %59, %60 : vector<17x64xf32>
    %62 = vector.extract_strided_slice %54 {offsets = [68, 0], sizes = [17, 64], strides = [1, 1]} : vector<136x64xf32> to vector<17x64xf32>
    %63 = arith.addf %61, %62 : vector<17x64xf32>
    %64 = vector.extract_strided_slice %54 {offsets = [85, 0], sizes = [17, 64], strides = [1, 1]} : vector<136x64xf32> to vector<17x64xf32>
    %65 = arith.addf %63, %64 : vector<17x64xf32>
    %66 = vector.extract_strided_slice %54 {offsets = [102, 0], sizes = [17, 64], strides = [1, 1]} : vector<136x64xf32> to vector<17x64xf32>
    %67 = arith.addf %65, %66 : vector<17x64xf32>
    %68 = vector.extract_strided_slice %54 {offsets = [119, 0], sizes = [17, 64], strides = [1, 1]} : vector<136x64xf32> to vector<17x64xf32>
    %69 = arith.addf %67, %68 : vector<17x64xf32>
    %70 = tpu.concatenate %36, %69 in 0 : vector<17x64xf32>, vector<17x64xf32> -> vector<34x64xf32>
    %c0_13 = arith.constant 0 : index
    %c0_14 = arith.constant 0 : index
    %71 = vector.load %arg4[%c0_13, %c0_14] : memref<64x64xf32, #tpu.memory_space<vmem>>, vector<64x64xf32>
    %cst_15 = arith.constant dense<0.000000e+00> : vector<34x64xf32>
    %72 = tpu.matmul %70, %71, %cst_15 {dimension_numbers = #tpu.dot_dimension_numbers<[1], [0], [0], [1], [0, 0, 1, 1], [], []>} : vector<34x64xf32>, vector<64x64xf32>, vector<34x64xf32> -> vector<34x64xf32>
    %c0_16 = arith.constant 0 : index
    %c0_17 = arith.constant 0 : index
    %73 = vector.load %arg5[%c0_16, %c0_17] : memref<1x64xf32, #tpu.memory_space<vmem>>, vector<1x64xf32>
    %74 = vector.broadcast %73 : vector<1x64xf32> to vector<34x64xf32>
    %75 = arith.addf %72, %74 : vector<34x64xf32>
    %76 = vector.extract_strided_slice %75 {offsets = [0, 0], sizes = [17, 64], strides = [1, 1]} : vector<34x64xf32> to vector<17x64xf32>
    %77 = vector.extract_strided_slice %75 {offsets = [17, 0], sizes = [17, 64], strides = [1, 1]} : vector<34x64xf32> to vector<17x64xf32>
    %78 = tpu.concatenate %76, %77 in 1 : vector<17x64xf32>, vector<17x64xf32> -> vector<17x128xf32>
    %c0_18 = arith.constant 0 : index
    %c0_19 = arith.constant 0 : index
    %79 = vector.load %arg6[%c0_18, %c0_19] : memref<17x128xf32, #tpu.memory_space<vmem>>, vector<17x128xf32>
    tpu.vector_store %arg6[%c0_18, %c0_19], %78 {strides = array<i32>} : memref<17x128xf32, #tpu.memory_space<vmem>>, vector<17x128xf32>,
    return
  }
  func.func @transform_0(%arg0: i32) -> (i32, i32) {
    %c0_i32 = arith.constant 0 : i32
    %c0_i32_0 = arith.constant 0 : i32
    %c0_i32_1 = arith.constant 0 : i32
    return %c0_i32, %c0_i32_0 : i32, i32
  }
  func.func @transform_1(%arg0: i32) -> (i32, i32) {
    %c0_i32 = arith.constant 0 : i32
    %c0_i32_0 = arith.constant 0 : i32
    %c0_i32_1 = arith.constant 0 : i32
    return %c0_i32, %c0_i32_0 : i32, i32
  }
  func.func @transform_2(%arg0: i32) -> (i32, i32) {
    %c0_i32 = arith.constant 0 : i32
    %c0_i32_0 = arith.constant 0 : i32
    %c0_i32_1 = arith.constant 0 : i32
    return %c0_i32, %c0_i32_0 : i32, i32
  }
  func.func @transform_3(%arg0: i32) -> (i32, i32) {
    %c0_i32 = arith.constant 0 : i32
    %c0_i32_0 = arith.constant 0 : i32
    %c0_i32_1 = arith.constant 0 : i32
    return %c0_i32, %c0_i32_0 : i32, i32
  }
  func.func @transform_4(%arg0: i32) -> (i32, i32) {
    %c0_i32 = arith.constant 0 : i32
    %c0_i32_0 = arith.constant 0 : i32
    %c0_i32_1 = arith.constant 0 : i32
    return %c0_i32, %c0_i32_0 : i32, i32
  }
  func.func @transform_5(%arg0: i32) -> (i32, i32) {
    %c0_i32 = arith.constant 0 : i32
    %c0_i32_0 = arith.constant 0 : i32
    %c0_i32_1 = arith.constant 0 : i32
    return %c0_i32, %c0_i32_0 : i32, i32
  }
}

</mosaic_0001>

<llo_original>
// kernel: tpu_custom_call.1
$region0: #{tpu_custom_call.1}
  #allocation0 [shape = 'u32[]', space=smem, size = 0x4, offset = 0x4, fixed_abs, tag = 'smem constant byte address 0x4 - core index']
  #allocation1 [shape = 'u32[144,128]{1,0:T(1,128)}', space=vmem, size = 0x12000, scoped, tag = 'internal scratch']
  %s0 = inlined_call_operand.vmem [shape: f32[34,64], index: 0, kind: input, shape index: {}]
  %s1 = inlined_call_operand.vmem [shape: f32[64,192], index: 1, kind: input, shape index: {}]
  %s2 = inlined_call_operand.vmem [shape: f32[136,64], index: 2, kind: input, shape index: {}]
  %s3 = inlined_call_operand.vmem [shape: f32[64,64], index: 3, kind: input, shape index: {}]
  %s4 = inlined_call_operand.vmem [shape: f32[1,64], index: 4, kind: input, shape index: {}]
  %s5 = inlined_call_operand.hbm [shape: f32[17,128], index: 5, kind: output, shape index: {}]
  %s6 = sld [smem:[#allocation0]]
  $region30: #{tpu_custom_call.1} parent=0
    _
  %s8 = ssub.s32 1, %s6
  %s9 = scalar_select 0, %s8, %s6
  $region1: #{tpu_custom_call.1} parent=0
    #allocation2 [shape = 'u8[12288]{0}', space=vmem, size = 0x3000, scoped, tag = 'output window, operand 0, single buffered']
    #allocation3 [shape = 's32[1]{0}', space=sflag, size = 0x4, scoped, tag = 'scoped memory for tpu_custom_call.1']
    %10 = vsyncpa [#allocation3], 0
    // Predicated region
    $region2: #{tpu_custom_call.1} parent=1 // pred_check
      _
    $region3: #{tpu_custom_call.1} parent=1 // pred_check_branch
      %12 = sbr.rel (0) target = $region5
    $region4: #{tpu_custom_call.1} parent=1 // pred_region
      _
    $region5: #{tpu_custom_call.1} parent=1 // pred_fallthru
      _
    // Predicated region
    $region6: #{tpu_custom_call.1} parent=1 // pred_check
      _
    $region7: #{tpu_custom_call.1} parent=1 // pred_check_branch
      %14 = sbr.rel (0) target = $region9
    $region8: #{tpu_custom_call.1} parent=1 // pred_region
      _
    $region9: #{tpu_custom_call.1} parent=1 // pred_fallthru
      _
    // Predicated region
    $region10: #{tpu_custom_call.1} parent=1 // pred_check
      _
    $region11: #{tpu_custom_call.1} parent=1 // pred_check_branch
      %16 = sbr.rel (0) target = $region13
    $region12: #{tpu_custom_call.1} parent=1 // pred_region
      _
    $region13: #{tpu_custom_call.1} parent=1 // pred_fallthru
      _
    // Predicated region
    $region14: #{tpu_custom_call.1} parent=1 // pred_check
      _
    $region15: #{tpu_custom_call.1} parent=1 // pred_check_branch
      %18 = sbr.rel (0) target = $region17
    $region16: #{tpu_custom_call.1} parent=1 // pred_region
      _
    $region17: #{tpu_custom_call.1} parent=1 // pred_fallthru
      _
    // Predicated region
    $region18: #{tpu_custom_call.1} parent=1 // pred_check
      _
    $region19: #{tpu_custom_call.1} parent=1 // pred_check_branch
      %20 = sbr.rel (0) target = $region21
    $region20: #{tpu_custom_call.1} parent=1 // pred_region
      _
    $region21: #{tpu_custom_call.1} parent=1 // pred_fallthru
      _
    %v21 = vld [vmem:[%s0] sm:$0xff]
    %v22 = vld [vmem:[%s0 + $0x8] sm:$0xff]
    %v23 = vld [vmem:[%s0 + $0x10] sm:$0xff]
    %v24 = vld [vmem:[%s0 + $0x18] sm:$0xff]
    %v25 = vld [vmem:[%s0 + $0x20] sm:$0x3]
    %v26 = vld [vmem:[%s1] sm:$0xff]
    %v27 = vld [vmem:[%s1 + $0x8] sm:$0xff]
    %v28 = vld [vmem:[%s1 + $0x10] sm:$0xff]
    %v29 = vld [vmem:[%s1 + $0x18] sm:$0xff]
    %v30 = vld [vmem:[%s1 + $0x20] sm:$0xff]
    %v31 = vld [vmem:[%s1 + $0x28] sm:$0xff]
    %v32 = vld [vmem:[%s1 + $0x30] sm:$0xff]
    %v33 = vld [vmem:[%s1 + $0x38] sm:$0xff]
    %v34 = vld [vmem:[%s1 + $0x40] sm:$0xff]
    %v35 = vld [vmem:[%s1 + $0x48] sm:$0xff]
    %v36 = vld [vmem:[%s1 + $0x50] sm:$0xff]
    %v37 = vld [vmem:[%s1 + $0x58] sm:$0xff]
    %v38 = vld [vmem:[%s1 + $0x60] sm:$0xff]
    %v39 = vld [vmem:[%s1 + $0x68] sm:$0xff]
    %v40 = vld [vmem:[%s1 + $0x70] sm:$0xff]
    %v41 = vld [vmem:[%s1 + $0x78] sm:$0xff]
    %vm42 = vcmask 523264
    %v44 = vsel %vm42, %v21, 0
    %v47 = vsel %vm42, %v22, 0
    %v50 = vsel %vm42, %v23, 0
    %v53 = vsel %vm42, %v24, 0
    %v56 = vsel %vm42, %v25, 0
    %58 = vmatprep.subr.mxu0 %v27
    %59 = vmatpush1.msra.mxu0 %v26
    %60 = vmatprep.subr.mxu0 %v29
    %61 = vmatpush1.msra.mxu0 %v28
    %62 = vmatprep.subr.mxu0 %v31
    %63 = vmatpush1.msra.mxu0 %v30
    %64 = vmatprep.subr.mxu0 %v33
    %65 = vmatpush1.msra.mxu0 %v32
    %66 = vmatprep.subr.mxu0 %v35
    %67 = vmatpush1.msra.mxu0 %v34
    %68 = vmatprep.subr.mxu0 %v37
    %69 = vmatpush1.msra.mxu0 %v36
    %70 = vmatprep.subr.mxu0 %v39
    %71 = vmatpush1.msra.mxu0 %v38
    %72 = vmatprep.subr.mxu0 %v41
    %73 = vmatpush1.msra.mxu0 %v40
    %74 = vmatprep.subr.mxu0 0.0
    %75 = vmatpush1.msra.mxu0 0.0
    %76 = vmatprep.subr.mxu0 0.0
    %77 = vmatpush1.msra.mxu0 0.0
    %78 = vmatprep.subr.mxu0 0.0
    %79 = vmatpush1.msra.mxu0 0.0
    %80 = vmatprep.subr.mxu0 0.0
    %81 = vmatpush1.msra.mxu0 0.0
    %82 = vmatprep.subr.mxu0 0.0
    %83 = vmatpush1.msra.mxu0 0.0
    %84 = vmatprep.subr.mxu0 0.0
    %85 = vmatpush1.msra.mxu0 0.0
    %86 = vmatprep.subr.mxu0 0.0
    %87 = vmatpush1.msra.mxu0 0.0
    %88 = vmatprep.subr.mxu0 0.0
    %89 = vmatpush1.msra.mxu0 0.0
    %90 = vmatprep.subr.mxu0 0.0
    %91 = vmatpush1.msra.mxu0 0.0
    %92 = vmatprep.subr.mxu0 0.0
    %93 = vmatpush1.msra.mxu0 0.0
    %94 = vmatprep.subr.mxu0 0.0
    %95 = vmatpush1.msra.mxu0 0.0
    %96 = vmatprep.subr.mxu0 0.0
    %97 = vmatpush1.msra.mxu0 0.0
    %98 = vmatprep.subr.mxu0 0.0
    %99 = vmatpush1.msra.mxu0 0.0
    %100 = vmatprep.subr.mxu0 0.0
    %101 = vmatpush1.msra.mxu0 0.0
    %102 = vmatprep.subr.mxu0 0.0
    %103 = vmatpush1.msra.mxu0 0.0
    %104 = vmatprep.subr.mxu0 0.0
    %105 = vmatpush1.msra.mxu0 0.0
    %106 = vmatprep.subr.mxu0 0.0
    %107 = vmatpush1.msra.mxu0 0.0
    %108 = vmatprep.subr.mxu0 0.0
    %109 = vmatpush1.msra.mxu0 0.0
    %110 = vmatprep.subr.mxu0 0.0
    %111 = vmatpush1.msra.mxu0 0.0
    %112 = vmatprep.subr.mxu0 0.0
    %113 = vmatpush1.msra.mxu0 0.0
    %114 = vmatprep.subr.mxu0 0.0
    %115 = vmatpush1.msra.mxu0 0.0
    %116 = vmatprep.subr.mxu0 0.0
    %117 = vmatpush1.msra.mxu0 0.0
    %118 = vmatprep.subr.mxu0 0.0
    %119 = vmatpush1.msra.mxu0 0.0
    %120 = vmatprep.subr.mxu0 0.0
    %121 = vmatpush1.msra.mxu0 0.0
    %122 = vmatprep.mubr.f32.mxu0 0.0
    %123 = vmatmul.mubr.f32.gmra.mrb[0].mxu0 %v44
    %v124 = vpop.f32.mrb[0].mxu0
    %v125 = vadd.f32 0.0, %v124
    %v126 = vpop.f32.mrb[0].mxu0
    %v127 = vadd.f32 0.0, %v126
    %128 = vmatprep.mubr.f32.mxu0 0.0
    %129 = vmatmul.mubr.f32.gmra.mrb[0].mxu0 %v47
    %v130 = vpop.f32.mrb[0].mxu0
    %v131 = vadd.f32 0.0, %v130
    %v132 = vpop.f32.mrb[0].mxu0
    %v133 = vadd.f32 0.0, %v132
    %134 = vmatprep.mubr.f32.mxu0 0.0
    %135 = vmatmul.mubr.f32.gmra.mrb[0].mxu0 %v50
    %v136 = vpop.f32.mrb[0].mxu0
    %v137 = vadd.f32 0.0, %v136
    %v138 = vpop.f32.mrb[0].mxu0
    %v139 = vadd.f32 0.0, %v138
    %140 = vmatprep.mubr.f32.mxu0 0.0
    %141 = vmatmul.mubr.f32.gmra.mrb[0].mxu0 %v53
    %v142 = vpop.f32.mrb[0].mxu0
    %v143 = vadd.f32 0.0, %v142
    %v144 = vpop.f32.mrb[0].mxu0
    %v145 = vadd.f32 0.0, %v144
    %146 = vmatprep.mubr.f32.mxu0 0.0
    %147 = vmatmul.mubr.f32.gmra.mrb[0].mxu0 %v56
    %v148 = vpop.f32.mrb[0].mxu0
    %v149 = vadd.f32 0.0, %v148
    %v150 = vpop.f32.mrb[0].mxu0
    %v151 = vadd.f32 0.0, %v150
    %152 = vdwg.mxu0
    %v153 = vld [vmem:[%s2] sm:$0xff]
    %v154 = vld [vmem:[%s2 + $0x8] sm:$0xff]
    %v155 = vld [vmem:[%s2 + $0x10] sm:$0xff]
    %v156 = vld [vmem:[%s2 + $0x18] sm:$0xff]
    %v157 = vld [vmem:[%s2 + $0x20] sm:$0xff]
    %v158 = vld [vmem:[%s2 + $0x28] sm:$0xff]
    %v159 = vld [vmem:[%s2 + $0x30] sm:$0xff]
    %v160 = vld [vmem:[%s2 + $0x38] sm:$0xff]
    %v161 = vld [vmem:[%s2 + $0x40] sm:$0xff]
    %v162 = vld [vmem:[%s2 + $0x48] sm:$0xff]
    %v163 = vld [vmem:[%s2 + $0x50] sm:$0xff]
    %v164 = vld [vmem:[%s2 + $0x58] sm:$0xff]
    %v165 = vld [vmem:[%s2 + $0x60] sm:$0xff]
    %v166 = vld [vmem:[%s2 + $0x68] sm:$0xff]
    %v167 = vld [vmem:[%s2 + $0x70] sm:$0xff]
    %v168 = vld [vmem:[%s2 + $0x78] sm:$0xff]
    %v169 = vld [vmem:[%s2 + $0x80] sm:$0xff]
    %vm173 = vcmask 1040384
    %v174 = vrot.slane %v125, 7
    %v175 = vrot.slane %v131, 7
    %v176 = vsel %vm173, %v174, %v175
    %v177 = vrot.slane %v137, 7
    %v178 = vsel %vm173, %v175, %v177
    %vm182 = vcmask 1041408
    %v183 = vrot.slane %v125, 6
    %v184 = vrot.slane %v131, 6
    %v185 = vsel %vm182, %v183, %v184
    %v186 = vrot.slane %v137, 6
    %v187 = vsel %vm182, %v184, %v186
    %vm191 = vcmask 1042432
    %v192 = vrot.slane %v125, 5
    %v193 = vrot.slane %v131, 5
    %v194 = vsel %vm191, %v192, %v193
    %v195 = vrot.slane %v137, 5
    %v196 = vsel %vm191, %v193, %v195
    %vm200 = vcmask 1043456
    %v201 = vrot.slane %v125, 4
    %v202 = vrot.slane %v131, 4
    %v203 = vsel %vm200, %v201, %v202
    %v204 = vrot.slane %v137, 4
    %v205 = vsel %vm200, %v202, %v204
    %vm209 = vcmask 1044480
    %v210 = vrot.slane %v125, 3
    %v211 = vrot.slane %v131, 3
    %v212 = vsel %vm209, %v210, %v211
    %v213 = vrot.slane %v137, 3
    %v214 = vsel %vm209, %v211, %v213
    %vm218 = vcmask 1045504
    %v219 = vrot.slane %v125, 2
    %v220 = vrot.slane %v131, 2
    %v221 = vsel %vm218, %v219, %v220
    %v222 = vrot.slane %v137, 2
    %v223 = vsel %vm218, %v220, %v222
    %vm227 = vcmask 1046528
    %v228 = vrot.slane %v125, 1
    %v229 = vrot.slane %v131, 1
    %v230 = vsel %vm227, %v228, %v229
    %v231 = vrot.slane %v137, 1
    %v232 = vsel %vm227, %v229, %v231
    %v236 = vsel %vm173, %v137, %v174
    %v237 = vsel %vm182, %v178, %v183
    %v238 = vsel %vm191, %v187, %v192
    %v239 = vsel %vm200, %v196, %v201
    %v240 = vsel %vm209, %v205, %v210
    %v241 = vsel %vm218, %v214, %v219
    %v242 = vsel %vm227, %v223, %v228
    %v243 = vmul.f32 %v125, %v153
    %v244 = vmul.f32 %v131, %v154
    %v245 = vmul.f32 %v236, %v155
    %v246 = vmul.f32 %v176, %v156
    %v247 = vmul.f32 %v237, %v157
    %v248 = vmul.f32 %v185, %v158
    %v249 = vmul.f32 %v238, %v159
    %v250 = vmul.f32 %v194, %v160
    %v251 = vmul.f32 %v239, %v161
    %v252 = vmul.f32 %v203, %v162
    %v253 = vmul.f32 %v240, %v163
    %v254 = vmul.f32 %v212, %v164
    %v255 = vmul.f32 %v241, %v165
    %v256 = vmul.f32 %v221, %v166
    %v257 = vmul.f32 %v242, %v167
    %v258 = vmul.f32 %v230, %v168
    %v259 = vmul.f32 %v232, %v169
    %260 = vrot.lane.b32.xlu0 %v125, 64
    %v261 = vpop.permute.xlu0 %260
    %262 = vrot.lane.b32.xlu0 %v131, 64
    %v263 = vpop.permute.xlu0 %262
    %264 = vrot.lane.b32.xlu0 %v137, 64
    %v265 = vpop.permute.xlu0 %264
    %v267 = vsel %vm42, %v243, 0
    %v270 = vsel %vm42, %v244, 0
    %v273 = vsel %vm42, %v245, 0
    %v276 = vsel %vm42, %v246, 0
    %v279 = vsel %vm42, %v247, 0
    %v282 = vsel %vm42, %v248, 0
    %v285 = vsel %vm42, %v249, 0
    %v288 = vsel %vm42, %v250, 0
    %v291 = vsel %vm42, %v251, 0
    %v294 = vsel %vm42, %v252, 0
    %v297 = vsel %vm42, %v253, 0
    %v300 = vsel %vm42, %v254, 0
    %v303 = vsel %vm42, %v255, 0
    %v306 = vsel %vm42, %v256, 0
    %v309 = vsel %vm42, %v257, 0
    %v312 = vsel %vm42, %v258, 0
    %v315 = vsel %vm42, %v259, 0
    %v317 = vsel %vm42, %v261, 0
    %v319 = vsel %vm42, %v263, 0
    %v321 = vsel %vm42, %v265, 0
    %323 = vmatprep.subr.mxu0 0.0
    %324 = vmatpush1.xpose.msra.mxu0 %v317
    %325 = vmatprep.subr.mxu0 0.0
    %326 = vmatpush1.xpose.msra.mxu0 %v319
    %327 = vmatprep.subr.mxu0 0.0
    %328 = vmatpush1.xpose.msra.mxu0 %v321
    %329 = vmatprep.subr.mxu0 0.0
    %330 = vmatpush1.xpose.msra.mxu0 0.0
    %331 = vmatprep.subr.mxu0 0.0
    %332 = vmatpush1.xpose.msra.mxu0 0.0
    %333 = vmatprep.subr.mxu0 0.0
    %334 = vmatpush1.xpose.msra.mxu0 0.0
    %335 = vmatprep.subr.mxu0 0.0
    %336 = vmatpush1.xpose.msra.mxu0 0.0
    %337 = vmatprep.subr.mxu0 0.0
    %338 = vmatpush1.xpose.msra.mxu0 0.0
    %339 = vmatprep.subr.mxu0 0.0
    %340 = vmatpush1.xpose.msra.mxu0 0.0
    %341 = vmatprep.subr.mxu0 0.0
    %342 = vmatpush1.xpose.msra.mxu0 0.0
    %343 = vmatprep.subr.mxu0 0.0
    %344 = vmatpush1.xpose.msra.mxu0 0.0
    %345 = vmatprep.subr.mxu0 0.0
    %346 = vmatpush1.xpose.msra.mxu0 0.0
    %347 = vmatprep.subr.mxu0 0.0
    %348 = vmatpush1.xpose.msra.mxu0 0.0
    %349 = vmatprep.subr.mxu0 0.0
    %350 = vmatpush1.xpose.msra.mxu0 0.0
    %351 = vmatprep.subr.mxu0 0.0
    %352 = vmatpush1.xpose.msra.mxu0 0.0
    %353 = vmatprep.subr.mxu0 0.0
    %354 = vmatpush1.xpose.msra.mxu0 0.0
    %355 = vmatprep.subr.mxu0 0.0
    %356 = vmatpush1.xpose.msra.mxu0 0.0
    %357 = vmatprep.subr.mxu0 0.0
    %358 = vmatpush1.xpose.msra.mxu0 0.0
    %359 = vmatprep.subr.mxu0 0.0
    %360 = vmatpush1.xpose.msra.mxu0 0.0
    %361 = vmatprep.subr.mxu0 0.0
    %362 = vmatpush1.xpose.msra.mxu0 0.0
    %363 = vmatprep.subr.mxu0 0.0
    %364 = vmatpush1.xpose.msra.mxu0 0.0
    %365 = vmatprep.subr.mxu0 0.0
    %366 = vmatpush1.xpose.msra.mxu0 0.0
    %367 = vmatprep.subr.mxu0 0.0
    %368 = vmatpush1.xpose.msra.mxu0 0.0
    %369 = vmatprep.subr.mxu0 0.0
    %370 = vmatpush1.xpose.msra.mxu0 0.0
    %371 = vmatprep.subr.mxu0 0.0
    %372 = vmatpush1.xpose.msra.mxu0 0.0
    %373 = vmatprep.subr.mxu0 0.0
    %374 = vmatpush1.xpose.msra.mxu0 0.0
    %375 = vmatprep.subr.mxu0 0.0
    %376 = vmatpush1.xpose.msra.mxu0 0.0
    %377 = vmatprep.subr.mxu0 0.0
    %378 = vmatpush1.xpose.msra.mxu0 0.0
    %379 = vmatprep.subr.mxu0 0.0
    %380 = vmatpush1.xpose.msra.mxu0 0.0
    %381 = vmatprep.subr.mxu0 0.0
    %382 = vmatpush1.xpose.msra.mxu0 0.0
    %383 = vmatprep.subr.mxu0 0.0
    %384 = vmatpush1.xpose.msra.mxu0 0.0
    %385 = vmatprep.subr.mxu0 0.0
    %386 = vmatpush1.xpose.msra.mxu0 0.0
    %387 = vmatprep.mubr.f32.mxu0 0.0
    %388 = vmatmul.mubr.f32.gmra.mrb[0].mxu0 %v267
    %v389 = vpop.f32.mrb[0].mxu0
    %v390 = vadd.f32 0.0, %v389
    %v391 = vpop.f32.mrb[0].mxu0
    %392 = vmatprep.mubr.f32.mxu0 0.0
    %393 = vmatmul.mubr.f32.gmra.mrb[0].mxu0 %v270
    %v394 = vpop.f32.mrb[0].mxu0
    %v395 = vadd.f32 0.0, %v394
    %v396 = vpop.f32.mrb[0].mxu0
    %397 = vmatprep.mubr.f32.mxu0 0.0
    %398 = vmatmul.mubr.f32.gmra.mrb[0].mxu0 %v273
    %v399 = vpop.f32.mrb[0].mxu0
    %v400 = vadd.f32 0.0, %v399
    %v401 = vpop.f32.mrb[0].mxu0
    %402 = vmatprep.mubr.f32.mxu0 0.0
    %403 = vmatmul.mubr.f32.gmra.mrb[0].mxu0 %v276
    %v404 = vpop.f32.mrb[0].mxu0
    %v405 = vadd.f32 0.0, %v404
    %v406 = vpop.f32.mrb[0].mxu0
    %407 = vmatprep.mubr.f32.mxu0 0.0
    %408 = vmatmul.mubr.f32.gmra.mrb[0].mxu0 %v279
    %v409 = vpop.f32.mrb[0].mxu0
    %v410 = vadd.f32 0.0, %v409
    %v411 = vpop.f32.mrb[0].mxu0
    %412 = vmatprep.mubr.f32.mxu0 0.0
    %413 = vmatmul.mubr.f32.gmra.mrb[0].mxu0 %v282
    %v414 = vpop.f32.mrb[0].mxu0
    %v415 = vadd.f32 0.0, %v414
    %v416 = vpop.f32.mrb[0].mxu0
    %417 = vmatprep.mubr.f32.mxu0 0.0
    %418 = vmatmul.mubr.f32.gmra.mrb[0].mxu0 %v285
    %v419 = vpop.f32.mrb[0].mxu0
    %v420 = vadd.f32 0.0, %v419
    %v421 = vpop.f32.mrb[0].mxu0
    %422 = vmatprep.mubr.f32.mxu0 0.0
    %423 = vmatmul.mubr.f32.gmra.mrb[0].mxu0 %v288
    %v424 = vpop.f32.mrb[0].mxu0
    %v425 = vadd.f32 0.0, %v424
    %v426 = vpop.f32.mrb[0].mxu0
    %427 = vmatprep.mubr.f32.mxu0 0.0
    %428 = vmatmul.mubr.f32.gmra.mrb[0].mxu0 %v291
    %v429 = vpop.f32.mrb[0].mxu0
    %v430 = vadd.f32 0.0, %v429
    %v431 = vpop.f32.mrb[0].mxu0
    %432 = vmatprep.mubr.f32.mxu0 0.0
    %433 = vmatmul.mubr.f32.gmra.mrb[0].mxu0 %v294
    %v434 = vpop.f32.mrb[0].mxu0
    %v435 = vadd.f32 0.0, %v434
    %v436 = vpop.f32.mrb[0].mxu0
    %437 = vmatprep.mubr.f32.mxu0 0.0
    %438 = vmatmul.mubr.f32.gmra.mrb[0].mxu0 %v297
    %v439 = vpop.f32.mrb[0].mxu0
    %v440 = vadd.f32 0.0, %v439
    %v441 = vpop.f32.mrb[0].mxu0
    %442 = vmatprep.mubr.f32.mxu0 0.0
    %443 = vmatmul.mubr.f32.gmra.mrb[0].mxu0 %v300
    %v444 = vpop.f32.mrb[0].mxu0
    %v445 = vadd.f32 0.0, %v444
    %v446 = vpop.f32.mrb[0].mxu0
    %447 = vmatprep.mubr.f32.mxu0 0.0
    %448 = vmatmul.mubr.f32.gmra.mrb[0].mxu0 %v303
    %v449 = vpop.f32.mrb[0].mxu0
    %v450 = vadd.f32 0.0, %v449
    %v451 = vpop.f32.mrb[0].mxu0
    %452 = vmatprep.mubr.f32.mxu0 0.0
    %453 = vmatmul.mubr.f32.gmra.mrb[0].mxu0 %v306
    %v454 = vpop.f32.mrb[0].mxu0
    %v455 = vadd.f32 0.0, %v454
    %v456 = vpop.f32.mrb[0].mxu0
    %457 = vmatprep.mubr.f32.mxu0 0.0
    %458 = vmatmul.mubr.f32.gmra.mrb[0].mxu0 %v309
    %v459 = vpop.f32.mrb[0].mxu0
    %v460 = vadd.f32 0.0, %v459
    %v461 = vpop.f32.mrb[0].mxu0
    %462 = vmatprep.mubr.f32.mxu0 0.0
    %463 = vmatmul.mubr.f32.gmra.mrb[0].mxu0 %v312
    %v464 = vpop.f32.mrb[0].mxu0
    %v465 = vadd.f32 0.0, %v464
    %v466 = vpop.f32.mrb[0].mxu0
    %467 = vmatprep.mubr.f32.mxu0 0.0
    %468 = vmatmul.mubr.f32.gmra.mrb[0].mxu0 %v315
    %v469 = vpop.f32.mrb[0].mxu0
    %v470 = vadd.f32 0.0, %v469
    %v471 = vpop.f32.mrb[0].mxu0
    %472 = vdwg.mxu0
    %vm473 = vcmask 138240
    %v474 = vsel %vm473, %v390, -inf
    %475 = vmax.xlane.f32.xlu0 %v474
    %v476 = vpop.xlane.xlu0 %475
    %v477 = vsel %vm473, %v395, -inf
    %478 = vmax.xlane.f32.xlu0 %v477
    %v479 = vpop.xlane.xlu0 %478
    %v480 = vsel %vm473, %v400, -inf
    %481 = vmax.xlane.f32.xlu0 %v480
    %v482 = vpop.xlane.xlu0 %481
    %v483 = vsel %vm473, %v405, -inf
    %484 = vmax.xlane.f32.xlu0 %v483
    %v485 = vpop.xlane.xlu0 %484
    %v486 = vsel %vm473, %v410, -inf
    %487 = vmax.xlane.f32.xlu0 %v486
    %v488 = vpop.xlane.xlu0 %487
    %v489 = vsel %vm473, %v415, -inf
    %490 = vmax.xlane.f32.xlu0 %v489
    %v491 = vpop.xlane.xlu0 %490
    %v492 = vsel %vm473, %v420, -inf
    %493 = vmax.xlane.f32.xlu0 %v492
    %v494 = vpop.xlane.xlu0 %493
    %v495 = vsel %vm473, %v425, -inf
    %496 = vmax.xlane.f32.xlu0 %v495
    %v497 = vpop.xlane.xlu0 %496
    %v498 = vsel %vm473, %v430, -inf
    %499 = vmax.xlane.f32.xlu0 %v498
    %v500 = vpop.xlane.xlu0 %499
    %v501 = vsel %vm473, %v435, -inf
    %502 = vmax.xlane.f32.xlu0 %v501
    %v503 = vpop.xlane.xlu0 %502
    %v504 = vsel %vm473, %v440, -inf
    %505 = vmax.xlane.f32.xlu0 %v504
    %v506 = vpop.xlane.xlu0 %505
    %v507 = vsel %vm473, %v445, -inf
    %508 = vmax.xlane.f32.xlu0 %v507
    %v509 = vpop.xlane.xlu0 %508
    %v510 = vsel %vm473, %v450, -inf
    %511 = vmax.xlane.f32.xlu0 %v510
    %v512 = vpop.xlane.xlu0 %511
    %v513 = vsel %vm473, %v455, -inf
    %514 = vmax.xlane.f32.xlu0 %v513
    %v515 = vpop.xlane.xlu0 %514
    %v516 = vsel %vm473, %v460, -inf
    %517 = vmax.xlane.f32.xlu0 %v516
    %v518 = vpop.xlane.xlu0 %517
    %v519 = vsel %vm473, %v465, -inf
    %520 = vmax.xlane.f32.xlu0 %v519
    %v521 = vpop.xlane.xlu0 %520
    %v522 = vsel %vm473, %v470, -inf
    %523 = vmax.xlane.f32.xlu0 %v522
    %v524 = vpop.xlane.xlu0 %523
    %v525 = vsub.f32 %v390, %v476
    %v526 = vsub.f32 %v395, %v479
    %v527 = vsub.f32 %v400, %v482
    %v528 = vsub.f32 %v405, %v485
    %v529 = vsub.f32 %v410, %v488
    %v530 = vsub.f32 %v415, %v491
    %v531 = vsub.f32 %v420, %v494
    %v532 = vsub.f32 %v425, %v497
    %v533 = vsub.f32 %v430, %v500
    %v534 = vsub.f32 %v435, %v503
    %v535 = vsub.f32 %v440, %v506
    %v536 = vsub.f32 %v445, %v509
    %v537 = vsub.f32 %v450, %v512
    %v538 = vsub.f32 %v455, %v515
    %v539 = vsub.f32 %v460, %v518
    %v540 = vsub.f32 %v465, %v521
    %v541 = vsub.f32 %v470, %v524
    %v542 = vmul.f32 %v525, 1.442695
    %v543 = vpow.pop %v542
    %v544 = vmul.f32 %v526, 1.442695
    %v545 = vpow.pop %v544
    %v546 = vmul.f32 %v527, 1.442695
    %v547 = vpow.pop %v546
    %v548 = vmul.f32 %v528, 1.442695
    %v549 = vpow.pop %v548
    %v550 = vmul.f32 %v529, 1.442695
    %v551 = vpow.pop %v550
    %v552 = vmul.f32 %v530, 1.442695
    %v553 = vpow.pop %v552
    %v554 = vmul.f32 %v531, 1.442695
    %v555 = vpow.pop %v554
    %v556 = vmul.f32 %v532, 1.442695
    %v557 = vpow.pop %v556
    %v558 = vmul.f32 %v533, 1.442695
    %v559 = vpow.pop %v558
    %v560 = vmul.f32 %v534, 1.442695
    %v561 = vpow.pop %v560
    %v562 = vmul.f32 %v535, 1.442695
    %v563 = vpow.pop %v562
    %v564 = vmul.f32 %v536, 1.442695
    %v565 = vpow.pop %v564
    %v566 = vmul.f32 %v537, 1.442695
    %v567 = vpow.pop %v566
    %v568 = vmul.f32 %v538, 1.442695
    %v569 = vpow.pop %v568
    %v570 = vmul.f32 %v539, 1.442695
    %v571 = vpow.pop %v570
    %v572 = vmul.f32 %v540, 1.442695
    %v573 = vpow.pop %v572
    %v574 = vmul.f32 %v541, 1.442695
    %v575 = vpow.pop %v574
    %v576 = vsel %vm473, %v543, 0.0
    %577 = vadd.xlane.f32.xlu0 %v576
    %v578 = vpop.xlane.xlu0 %577
    %v579 = vsel %vm473, %v545, 0.0
    %580 = vadd.xlane.f32.xlu0 %v579
    %v581 = vpop.xlane.xlu0 %580
    %v582 = vsel %vm473, %v547, 0.0
    %583 = vadd.xlane.f32.xlu0 %v582
    %v584 = vpop.xlane.xlu0 %583
    %v585 = vsel %vm473, %v549, 0.0
    %586 = vadd.xlane.f32.xlu0 %v585
    %v587 = vpop.xlane.xlu0 %586
    %v588 = vsel %vm473, %v551, 0.0
    %589 = vadd.xlane.f32.xlu0 %v588
    %v590 = vpop.xlane.xlu0 %589
    %v591 = vsel %vm473, %v553, 0.0
    %592 = vadd.xlane.f32.xlu0 %v591
    %v593 = vpop.xlane.xlu0 %592
    %v594 = vsel %vm473, %v555, 0.0
    %595 = vadd.xlane.f32.xlu0 %v594
    %v596 = vpop.xlane.xlu0 %595
    %v597 = vsel %vm473, %v557, 0.0
    %598 = vadd.xlane.f32.xlu0 %v597
    %v599 = vpop.xlane.xlu0 %598
    %v600 = vsel %vm473, %v559, 0.0
    %601 = vadd.xlane.f32.xlu0 %v600
    %v602 = vpop.xlane.xlu0 %601
    %v603 = vsel %vm473, %v561, 0.0
    %604 = vadd.xlane.f32.xlu0 %v603
    %v605 = vpop.xlane.xlu0 %604
    %v606 = vsel %vm473, %v563, 0.0
    %607 = vadd.xlane.f32.xlu0 %v606
    %v608 = vpop.xlane.xlu0 %607
    %v609 = vsel %vm473, %v565, 0.0
    %610 = vadd.xlane.f32.xlu0 %v609
    %v611 = vpop.xlane.xlu0 %610
    %v612 = vsel %vm473, %v567, 0.0
    %613 = vadd.xlane.f32.xlu0 %v612
    %v614 = vpop.xlane.xlu0 %613
    %v615 = vsel %vm473, %v569, 0.0
    %616 = vadd.xlane.f32.xlu0 %v615
    %v617 = vpop.xlane.xlu0 %616
    %v618 = vsel %vm473, %v571, 0.0
    %619 = vadd.xlane.f32.xlu0 %v618
    %v620 = vpop.xlane.xlu0 %619
    %v621 = vsel %vm473, %v573, 0.0
    %622 = vadd.xlane.f32.xlu0 %v621
    %v623 = vpop.xlane.xlu0 %622
    %v624 = vsel %vm473, %v575, 0.0
    %625 = vadd.xlane.f32.xlu0 %v624
    %v626 = vpop.xlane.xlu0 %625
    %v627 = vrcp.pop %v578
    %v628 = vrcp.pop %v581
    %v629 = vrcp.pop %v584
    %v630 = vrcp.pop %v587
    %v631 = vrcp.pop %v590
    %v632 = vrcp.pop %v593
    %v633 = vrcp.pop %v596
    %v634 = vrcp.pop %v599
    %v635 = vrcp.pop %v602
    %v636 = vrcp.pop %v605
    %v637 = vrcp.pop %v608
    %v638 = vrcp.pop %v611
    %v639 = vrcp.pop %v614
    %v640 = vrcp.pop %v617
    %v641 = vrcp.pop %v620
    %v642 = vrcp.pop %v623
    %v643 = vrcp.pop %v626
    %v644 = vmul.f32 %v543, %v627
    %v645 = vmul.f32 %v545, %v628
    %v646 = vmul.f32 %v547, %v629
    %v647 = vmul.f32 %v549, %v630
    %v648 = vmul.f32 %v551, %v631
    %v649 = vmul.f32 %v553, %v632
    %v650 = vmul.f32 %v555, %v633
    %v651 = vmul.f32 %v557, %v634
    %v652 = vmul.f32 %v559, %v635
    %v653 = vmul.f32 %v561, %v636
    %v654 = vmul.f32 %v563, %v637
    %v655 = vmul.f32 %v565, %v638
    %v656 = vmul.f32 %v567, %v639
    %v657 = vmul.f32 %v569, %v640
    %v658 = vmul.f32 %v571, %v641
    %v659 = vmul.f32 %v573, %v642
    %v660 = vmul.f32 %v575, %v643
    %v662 = vsel %vm473, %v644, 0
    %v665 = vsel %vm473, %v645, 0
    %v668 = vsel %vm473, %v646, 0
    %v671 = vsel %vm473, %v647, 0
    %v674 = vsel %vm473, %v648, 0
    %v677 = vsel %vm473, %v649, 0
    %v680 = vsel %vm473, %v650, 0
    %v683 = vsel %vm473, %v651, 0
    %v686 = vsel %vm473, %v652, 0
    %v689 = vsel %vm473, %v653, 0
    %v692 = vsel %vm473, %v654, 0
    %v695 = vsel %vm473, %v655, 0
    %v698 = vsel %vm473, %v656, 0
    %v701 = vsel %vm473, %v657, 0
    %v704 = vsel %vm473, %v658, 0
    %v707 = vsel %vm473, %v659, 0
    %v710 = vsel %vm473, %v660, 0
    %v713 = vsel %vm173, %v139, 0
    %715 = vmatprep.subr.mxu0 0.0
    %716 = vmatpush1.msra.mxu0 %v127
    %717 = vmatprep.subr.mxu0 0.0
    %718 = vmatpush1.msra.mxu0 %v133
    %719 = vmatprep.subr.mxu0 0.0
    %720 = vmatpush1.msra.mxu0 %v713
    %721 = vmatprep.subr.mxu0 0.0
    %722 = vmatpush1.msra.mxu0 0.0
    %723 = vmatprep.subr.mxu0 0.0
    %724 = vmatpush1.msra.mxu0 0.0
    %725 = vmatprep.subr.mxu0 0.0
    %726 = vmatpush1.msra.mxu0 0.0
    %727 = vmatprep.subr.mxu0 0.0
    %728 = vmatpush1.msra.mxu0 0.0
    %729 = vmatprep.subr.mxu0 0.0
    %730 = vmatpush1.msra.mxu0 0.0
    %731 = vmatprep.subr.mxu0 0.0
    %732 = vmatpush1.msra.mxu0 0.0
    %733 = vmatprep.subr.mxu0 0.0
    %734 = vmatpush1.msra.mxu0 0.0
    %735 = vmatprep.subr.mxu0 0.0
    %736 = vmatpush1.msra.mxu0 0.0
    %737 = vmatprep.subr.mxu0 0.0
    %738 = vmatpush1.msra.mxu0 0.0
    %739 = vmatprep.subr.mxu0 0.0
    %740 = vmatpush1.msra.mxu0 0.0
    %741 = vmatprep.subr.mxu0 0.0
    %742 = vmatpush1.msra.mxu0 0.0
    %743 = vmatprep.subr.mxu0 0.0
    %744 = vmatpush1.msra.mxu0 0.0
    %745 = vmatprep.subr.mxu0 0.0
    %746 = vmatpush1.msra.mxu0 0.0
    %747 = vmatprep.subr.mxu0 0.0
    %748 = vmatpush1.msra.mxu0 0.0
    %749 = vmatprep.subr.mxu0 0.0
    %750 = vmatpush1.msra.mxu0 0.0
    %751 = vmatprep.subr.mxu0 0.0
    %752 = vmatpush1.msra.mxu0 0.0
    %753 = vmatprep.subr.mxu0 0.0
    %754 = vmatpush1.msra.mxu0 0.0
    %755 = vmatprep.subr.mxu0 0.0
    %756 = vmatpush1.msra.mxu0 0.0
    %757 = vmatprep.subr.mxu0 0.0
    %758 = vmatpush1.msra.mxu0 0.0
    %759 = vmatprep.subr.mxu0 0.0
    %760 = vmatpush1.msra.mxu0 0.0
    %761 = vmatprep.subr.mxu0 0.0
    %762 = vmatpush1.msra.mxu0 0.0
    %763 = vmatprep.subr.mxu0 0.0
    %764 = vmatpush1.msra.mxu0 0.0
    %765 = vmatprep.subr.mxu0 0.0
    %766 = vmatpush1.msra.mxu0 0.0
    %767 = vmatprep.subr.mxu0 0.0
    %768 = vmatpush1.msra.mxu0 0.0
    %769 = vmatprep.subr.mxu0 0.0
    %770 = vmatpush1.msra.mxu0 0.0
    %771 = vmatprep.subr.mxu0 0.0
    %772 = vmatpush1.msra.mxu0 0.0
    %773 = vmatprep.subr.mxu0 0.0
    %774 = vmatpush1.msra.mxu0 0.0
    %775 = vmatprep.subr.mxu0 0.0
    %776 = vmatpush1.msra.mxu0 0.0
    %777 = vmatprep.subr.mxu0 0.0
    %778 = vmatpush1.msra.mxu0 0.0
    %779 = vmatprep.mubr.f32.mxu0 0.0
    %780 = vmatmul.mubr.f32.gmra.mrb[0].mxu0 %v662
    %v781 = vpop.f32.mrb[0].mxu0
    %v782 = vadd.f32 0.0, %v781
    %v783 = vpop.f32.mrb[0].mxu0
    %784 = vmatprep.mubr.f32.mxu0 0.0
    %785 = vmatmul.mubr.f32.gmra.mrb[0].mxu0 %v665
    %v786 = vpop.f32.mrb[0].mxu0
    %v787 = vadd.f32 0.0, %v786
    %v788 = vpop.f32.mrb[0].mxu0
    %789 = vmatprep.mubr.f32.mxu0 0.0
    %790 = vmatmul.mubr.f32.gmra.mrb[0].mxu0 %v668
    %v791 = vpop.f32.mrb[0].mxu0
    %v792 = vadd.f32 0.0, %v791
    %v793 = vpop.f32.mrb[0].mxu0
    %794 = vmatprep.mubr.f32.mxu0 0.0
    %795 = vmatmul.mubr.f32.gmra.mrb[0].mxu0 %v671
    %v796 = vpop.f32.mrb[0].mxu0
    %v797 = vadd.f32 0.0, %v796
    %v798 = vpop.f32.mrb[0].mxu0
    %799 = vmatprep.mubr.f32.mxu0 0.0
    %800 = vmatmul.mubr.f32.gmra.mrb[0].mxu0 %v674
    %v801 = vpop.f32.mrb[0].mxu0
    %v802 = vadd.f32 0.0, %v801
    %v803 = vpop.f32.mrb[0].mxu0
    %804 = vmatprep.mubr.f32.mxu0 0.0
    %805 = vmatmul.mubr.f32.gmra.mrb[0].mxu0 %v677
    %v806 = vpop.f32.mrb[0].mxu0
    %v807 = vadd.f32 0.0, %v806
    %v808 = vpop.f32.mrb[0].mxu0
    %809 = vmatprep.mubr.f32.mxu0 0.0
    %810 = vmatmul.mubr.f32.gmra.mrb[0].mxu0 %v680
    %v811 = vpop.f32.mrb[0].mxu0
    %v812 = vadd.f32 0.0, %v811
    %v813 = vpop.f32.mrb[0].mxu0
    %814 = vmatprep.mubr.f32.mxu0 0.0
    %815 = vmatmul.mubr.f32.gmra.mrb[0].mxu0 %v683
    %v816 = vpop.f32.mrb[0].mxu0
    %v817 = vadd.f32 0.0, %v816
    %v818 = vpop.f32.mrb[0].mxu0
    %819 = vmatprep.mubr.f32.mxu0 0.0
    %820 = vmatmul.mubr.f32.gmra.mrb[0].mxu0 %v686
    %v821 = vpop.f32.mrb[0].mxu0
    %v822 = vadd.f32 0.0, %v821
    %v823 = vpop.f32.mrb[0].mxu0
    %824 = vmatprep.mubr.f32.mxu0 0.0
    %825 = vmatmul.mubr.f32.gmra.mrb[0].mxu0 %v689
    %v826 = vpop.f32.mrb[0].mxu0
    %v827 = vadd.f32 0.0, %v826
    %v828 = vpop.f32.mrb[0].mxu0
    %829 = vmatprep.mubr.f32.mxu0 0.0
    %830 = vmatmul.mubr.f32.gmra.mrb[0].mxu0 %v692
    %v831 = vpop.f32.mrb[0].mxu0
    %v832 = vadd.f32 0.0, %v831
    %v833 = vpop.f32.mrb[0].mxu0
    %834 = vmatprep.mubr.f32.mxu0 0.0
    %835 = vmatmul.mubr.f32.gmra.mrb[0].mxu0 %v695
    %v836 = vpop.f32.mrb[0].mxu0
    %v837 = vadd.f32 0.0, %v836
    %v838 = vpop.f32.mrb[0].mxu0
    %839 = vmatprep.mubr.f32.mxu0 0.0
    %840 = vmatmul.mubr.f32.gmra.mrb[0].mxu0 %v698
    %v841 = vpop.f32.mrb[0].mxu0
    %v842 = vadd.f32 0.0, %v841
    %v843 = vpop.f32.mrb[0].mxu0
    %844 = vmatprep.mubr.f32.mxu0 0.0
    %845 = vmatmul.mubr.f32.gmra.mrb[0].mxu0 %v701
    %v846 = vpop.f32.mrb[0].mxu0
    %v847 = vadd.f32 0.0, %v846
    %v848 = vpop.f32.mrb[0].mxu0
    %849 = vmatprep.mubr.f32.mxu0 0.0
    %850 = vmatmul.mubr.f32.gmra.mrb[0].mxu0 %v704
    %v851 = vpop.f32.mrb[0].mxu0
    %v852 = vadd.f32 0.0, %v851
    %v853 = vpop.f32.mrb[0].mxu0
    %854 = vmatprep.mubr.f32.mxu0 0.0
    %855 = vmatmul.mubr.f32.gmra.mrb[0].mxu0 %v707
    %v856 = vpop.f32.mrb[0].mxu0
    %v857 = vadd.f32 0.0, %v856
    %v858 = vpop.f32.mrb[0].mxu0
    %859 = vmatprep.mubr.f32.mxu0 0.0
    %860 = vmatmul.mubr.f32.gmra.mrb[0].mxu0 %v710
    %v861 = vpop.f32.mrb[0].mxu0
    %v862 = vadd.f32 0.0, %v861
    %v863 = vpop.f32.mrb[0].mxu0
    %864 = vdwg.mxu0
    %v865 = vmul.f32 %v782, %v153
    %v866 = vmul.f32 %v787, %v154
    %v867 = vmul.f32 %v792, %v155
    %v868 = vmul.f32 %v797, %v156
    %v869 = vmul.f32 %v802, %v157
    %v870 = vmul.f32 %v807, %v158
    %v871 = vmul.f32 %v812, %v159
    %v872 = vmul.f32 %v817, %v160
    %v873 = vmul.f32 %v822, %v161
    %v874 = vmul.f32 %v827, %v162
    %v875 = vmul.f32 %v832, %v163
    %v876 = vmul.f32 %v837, %v164
    %v877 = vmul.f32 %v842, %v165
    %v878 = vmul.f32 %v847, %v166
    %v879 = vmul.f32 %v852, %v167
    %v880 = vmul.f32 %v857, %v168
    %v881 = vmul.f32 %v862, %v169
    %v885 = vrot.slane %v867, 1
    %v886 = vrot.slane %v868, 1
    %v887 = vsel %vm227, %v885, %v886
    %v888 = vrot.slane %v869, 1
    %v889 = vsel %vm227, %v886, %v888
    %v893 = vadd.f32 %v865, %v887
    %v894 = vadd.f32 %v866, %v889
    %v895 = vadd.f32 %v867, %v888
    %v898 = vrot.slane %v869, 2
    %v899 = vrot.slane %v870, 2
    %v900 = vsel %vm218, %v898, %v899
    %v901 = vrot.slane %v871, 2
    %v902 = vsel %vm218, %v899, %v901
    %v906 = vadd.f32 %v893, %v900
    %v907 = vadd.f32 %v894, %v902
    %v908 = vadd.f32 %v895, %v901
    %v911 = vrot.slane %v871, 3
    %v912 = vrot.slane %v872, 3
    %v913 = vsel %vm209, %v911, %v912
    %v914 = vrot.slane %v873, 3
    %v915 = vsel %vm209, %v912, %v914
    %v919 = vadd.f32 %v906, %v913
    %v920 = vadd.f32 %v907, %v915
    %v921 = vadd.f32 %v908, %v914
    %v924 = vrot.slane %v873, 4
    %v925 = vrot.slane %v874, 4
    %v926 = vsel %vm200, %v924, %v925
    %v927 = vrot.slane %v875, 4
    %v928 = vsel %vm200, %v925, %v927
    %v932 = vadd.f32 %v919, %v926
    %v933 = vadd.f32 %v920, %v928
    %v934 = vadd.f32 %v921, %v927
    %v937 = vrot.slane %v875, 5
    %v938 = vrot.slane %v876, 5
    %v939 = vsel %vm191, %v937, %v938
    %v940 = vrot.slane %v877, 5
    %v941 = vsel %vm191, %v938, %v940
    %v945 = vadd.f32 %v932, %v939
    %v946 = vadd.f32 %v933, %v941
    %v947 = vadd.f32 %v934, %v940
    %v950 = vrot.slane %v877, 6
    %v951 = vrot.slane %v878, 6
    %v952 = vsel %vm182, %v950, %v951
    %v953 = vrot.slane %v879, 6
    %v954 = vsel %vm182, %v951, %v953
    %v958 = vadd.f32 %v945, %v952
    %v959 = vadd.f32 %v946, %v954
    %v960 = vadd.f32 %v947, %v953
    %v963 = vrot.slane %v879, 7
    %v964 = vrot.slane %v880, 7
    %v965 = vsel %vm173, %v963, %v964
    %v966 = vrot.slane %v881, 7
    %v967 = vsel %vm173, %v964, %v966
    %v971 = vadd.f32 %v958, %v965
    %v972 = vadd.f32 %v959, %v967
    %v973 = vadd.f32 %v960, %v966
    %v976 = vrot.slane %v143, 1
    %v977 = vsel %vm227, %v231, %v976
    %v978 = vrot.slane %v149, 1
    %v979 = vsel %vm227, %v976, %v978
    %v983 = vrot.slane %v143, 7
    %v984 = vsel %vm173, %v177, %v983
    %v985 = vrot.slane %v149, 7
    %v986 = vsel %vm173, %v983, %v985
    %v990 = vrot.slane %v143, 6
    %v991 = vsel %vm182, %v186, %v990
    %v992 = vrot.slane %v149, 6
    %v993 = vsel %vm182, %v990, %v992
    %v997 = vrot.slane %v143, 5
    %v998 = vsel %vm191, %v195, %v997
    %v999 = vrot.slane %v149, 5
    %v1000 = vsel %vm191, %v997, %v999
    %v1004 = vrot.slane %v143, 4
    %v1005 = vsel %vm200, %v204, %v1004
    %v1006 = vrot.slane %v149, 4
    %v1007 = vsel %vm200, %v1004, %v1006
    %v1011 = vrot.slane %v143, 3
    %v1012 = vsel %vm209, %v213, %v1011
    %v1013 = vrot.slane %v149, 3
    %v1014 = vsel %vm209, %v1011, %v1013
    %v1018 = vrot.slane %v143, 2
    %v1019 = vsel %vm218, %v222, %v1018
    %v1020 = vrot.slane %v149, 2
    %v1021 = vsel %vm218, %v1018, %v1020
    %v1025 = vsel %vm173, %v978, %v137
    %v1026 = vsel %vm182, %v149, %v177
    %v1027 = vsel %vm191, %v986, %v186
    %v1028 = vsel %vm200, %v993, %v195
    %v1029 = vsel %vm209, %v1000, %v204
    %v1030 = vsel %vm218, %v1007, %v213
    %v1031 = vsel %vm227, %v1014, %v222
    %v1032 = vmul.f32 %v977, %v153
    %v1033 = vmul.f32 %v979, %v154
    %v1034 = vmul.f32 %v1025, %v155
    %v1035 = vmul.f32 %v143, %v156
    %v1036 = vmul.f32 %v1026, %v157
    %v1037 = vmul.f32 %v984, %v158
    %v1038 = vmul.f32 %v1027, %v159
    %v1039 = vmul.f32 %v991, %v160
    %v1040 = vmul.f32 %v1028, %v161
    %v1041 = vmul.f32 %v998, %v162
    %v1042 = vmul.f32 %v1029, %v163
    %v1043 = vmul.f32 %v1005, %v164
    %v1044 = vmul.f32 %v1030, %v165
    %v1045 = vmul.f32 %v1012, %v166
    %v1046 = vmul.f32 %v1031, %v167
    %v1047 = vmul.f32 %v1019, %v168
    %v1048 = vmul.f32 %v1021, %v169
    %1049 = vrot.lane.b32.xlu0 %v977, 64
    %v1050 = vpop.permute.xlu0 %1049
    %1051 = vrot.lane.b32.xlu0 %v979, 64
    %v1052 = vpop.permute.xlu0 %1051
    %1053 = vrot.lane.b32.xlu0 %v978, 64
    %v1054 = vpop.permute.xlu0 %1053
    %v1056 = vsel %vm42, %v1032, 0
    %v1059 = vsel %vm42, %v1033, 0
    %v1062 = vsel %vm42, %v1034, 0
    %v1065 = vsel %vm42, %v1035, 0
    %v1068 = vsel %vm42, %v1036, 0
    %v1071 = vsel %vm42, %v1037, 0
    %v1074 = vsel %vm42, %v1038, 0
    %v1077 = vsel %vm42, %v1039, 0
    %v1080 = vsel %vm42, %v1040, 0
    %v1083 = vsel %vm42, %v1041, 0
    %v1086 = vsel %vm42, %v1042, 0
    %v1089 = vsel %vm42, %v1043, 0
    %v1092 = vsel %vm42, %v1044, 0
    %v1095 = vsel %vm42, %v1045, 0
    %v1098 = vsel %vm42, %v1046, 0
    %v1101 = vsel %vm42, %v1047, 0
    %v1104 = vsel %vm42, %v1048, 0
    %v1106 = vsel %vm42, %v1050, 0
    %v1108 = vsel %vm42, %v1052, 0
    %v1110 = vsel %vm42, %v1054, 0
    %1112 = vmatprep.subr.mxu0 0.0
    %1113 = vmatpush1.xpose.msra.mxu0 %v1106
    %1114 = vmatprep.subr.mxu0 0.0
    %1115 = vmatpush1.xpose.msra.mxu0 %v1108
    %1116 = vmatprep.subr.mxu0 0.0
    %1117 = vmatpush1.xpose.msra.mxu0 %v1110
    %1118 = vmatprep.subr.mxu0 0.0
    %1119 = vmatpush1.xpose.msra.mxu0 0.0
    %1120 = vmatprep.subr.mxu0 0.0
    %1121 = vmatpush1.xpose.msra.mxu0 0.0
    %1122 = vmatprep.subr.mxu0 0.0
    %1123 = vmatpush1.xpose.msra.mxu0 0.0
    %1124 = vmatprep.subr.mxu0 0.0
    %1125 = vmatpush1.xpose.msra.mxu0 0.0
    %1126 = vmatprep.subr.mxu0 0.0
    %1127 = vmatpush1.xpose.msra.mxu0 0.0
    %1128 = vmatprep.subr.mxu0 0.0
    %1129 = vmatpush1.xpose.msra.mxu0 0.0
    %1130 = vmatprep.subr.mxu0 0.0
    %1131 = vmatpush1.xpose.msra.mxu0 0.0
    %1132 = vmatprep.subr.mxu0 0.0
    %1133 = vmatpush1.xpose.msra.mxu0 0.0
    %1134 = vmatprep.subr.mxu0 0.0
    %1135 = vmatpush1.xpose.msra.mxu0 0.0
    %1136 = vmatprep.subr.mxu0 0.0
    %1137 = vmatpush1.xpose.msra.mxu0 0.0
    %1138 = vmatprep.subr.mxu0 0.0
    %1139 = vmatpush1.xpose.msra.mxu0 0.0
    %1140 = vmatprep.subr.mxu0 0.0
    %1141 = vmatpush1.xpose.msra.mxu0 0.0
    %1142 = vmatprep.subr.mxu0 0.0
    %1143 = vmatpush1.xpose.msra.mxu0 0.0
    %1144 = vmatprep.subr.mxu0 0.0
    %1145 = vmatpush1.xpose.msra.mxu0 0.0
    %1146 = vmatprep.subr.mxu0 0.0
    %1147 = vmatpush1.xpose.msra.mxu0 0.0
    %1148 = vmatprep.subr.mxu0 0.0
    %1149 = vmatpush1.xpose.msra.mxu0 0.0
    %1150 = vmatprep.subr.mxu0 0.0
    %1151 = vmatpush1.xpose.msra.mxu0 0.0
    %1152 = vmatprep.subr.mxu0 0.0
    %1153 = vmatpush1.xpose.msra.mxu0 0.0
    %1154 = vmatprep.subr.mxu0 0.0
    %1155 = vmatpush1.xpose.msra.mxu0 0.0
    %1156 = vmatprep.subr.mxu0 0.0
    %1157 = vmatpush1.xpose.msra.mxu0 0.0
    %1158 = vmatprep.subr.mxu0 0.0
    %1159 = vmatpush1.xpose.msra.mxu0 0.0
    %1160 = vmatprep.subr.mxu0 0.0
    %1161 = vmatpush1.xpose.msra.mxu0 0.0
    %1162 = vmatprep.subr.mxu0 0.0
    %1163 = vmatpush1.xpose.msra.mxu0 0.0
    %1164 = vmatprep.subr.mxu0 0.0
    %1165 = vmatpush1.xpose.msra.mxu0 0.0
    %1166 = vmatprep.subr.mxu0 0.0
    %1167 = vmatpush1.xpose.msra.mxu0 0.0
    %1168 = vmatprep.subr.mxu0 0.0
    %1169 = vmatpush1.xpose.msra.mxu0 0.0
    %1170 = vmatprep.subr.mxu0 0.0
    %1171 = vmatpush1.xpose.msra.mxu0 0.0
    %1172 = vmatprep.subr.mxu0 0.0
    %1173 = vmatpush1.xpose.msra.mxu0 0.0
    %1174 = vmatprep.subr.mxu0 0.0
    %1175 = vmatpush1.xpose.msra.mxu0 0.0
    %1176 = vmatprep.mubr.f32.mxu0 0.0
    %1177 = vmatmul.mubr.f32.gmra.mrb[0].mxu0 %v1056
    %v1178 = vpop.f32.mrb[0].mxu0
    %v1179 = vadd.f32 0.0, %v1178
    %v1180 = vpop.f32.mrb[0].mxu0
    %1181 = vmatprep.mubr.f32.mxu0 0.0
    %1182 = vmatmul.mubr.f32.gmra.mrb[0].mxu0 %v1059
    %v1183 = vpop.f32.mrb[0].mxu0
    %v1184 = vadd.f32 0.0, %v1183
    %v1185 = vpop.f32.mrb[0].mxu0
    %1186 = vmatprep.mubr.f32.mxu0 0.0
    %1187 = vmatmul.mubr.f32.gmra.mrb[0].mxu0 %v1062
    %v1188 = vpop.f32.mrb[0].mxu0
    %v1189 = vadd.f32 0.0, %v1188
    %v1190 = vpop.f32.mrb[0].mxu0
    %1191 = vmatprep.mubr.f32.mxu0 0.0
    %1192 = vmatmul.mubr.f32.gmra.mrb[0].mxu0 %v1065
    %v1193 = vpop.f32.mrb[0].mxu0
    %v1194 = vadd.f32 0.0, %v1193
    %v1195 = vpop.f32.mrb[0].mxu0
    %1196 = vmatprep.mubr.f32.mxu0 0.0
    %1197 = vmatmul.mubr.f32.gmra.mrb[0].mxu0 %v1068
    %v1198 = vpop.f32.mrb[0].mxu0
    %v1199 = vadd.f32 0.0, %v1198
    %v1200 = vpop.f32.mrb[0].mxu0
    %1201 = vmatprep.mubr.f32.mxu0 0.0
    %1202 = vmatmul.mubr.f32.gmra.mrb[0].mxu0 %v1071
    %v1203 = vpop.f32.mrb[0].mxu0
    %v1204 = vadd.f32 0.0, %v1203
    %v1205 = vpop.f32.mrb[0].mxu0
    %1206 = vmatprep.mubr.f32.mxu0 0.0
    %1207 = vmatmul.mubr.f32.gmra.mrb[0].mxu0 %v1074
    %v1208 = vpop.f32.mrb[0].mxu0
    %v1209 = vadd.f32 0.0, %v1208
    %v1210 = vpop.f32.mrb[0].mxu0
    %1211 = vmatprep.mubr.f32.mxu0 0.0
    %1212 = vmatmul.mubr.f32.gmra.mrb[0].mxu0 %v1077
    %v1213 = vpop.f32.mrb[0].mxu0
    %v1214 = vadd.f32 0.0, %v1213
    %v1215 = vpop.f32.mrb[0].mxu0
    %1216 = vmatprep.mubr.f32.mxu0 0.0
    %1217 = vmatmul.mubr.f32.gmra.mrb[0].mxu0 %v1080
    %v1218 = vpop.f32.mrb[0].mxu0
    %v1219 = vadd.f32 0.0, %v1218
    %v1220 = vpop.f32.mrb[0].mxu0
    %1221 = vmatprep.mubr.f32.mxu0 0.0
    %1222 = vmatmul.mubr.f32.gmra.mrb[0].mxu0 %v1083
    %v1223 = vpop.f32.mrb[0].mxu0
    %v1224 = vadd.f32 0.0, %v1223
    %v1225 = vpop.f32.mrb[0].mxu0
    %1226 = vmatprep.mubr.f32.mxu0 0.0
    %1227 = vmatmul.mubr.f32.gmra.mrb[0].mxu0 %v1086
    %v1228 = vpop.f32.mrb[0].mxu0
    %v1229 = vadd.f32 0.0, %v1228
    %v1230 = vpop.f32.mrb[0].mxu0
    %1231 = vmatprep.mubr.f32.mxu0 0.0
    %1232 = vmatmul.mubr.f32.gmra.mrb[0].mxu0 %v1089
    %v1233 = vpop.f32.mrb[0].mxu0
    %v1234 = vadd.f32 0.0, %v1233
    %v1235 = vpop.f32.mrb[0].mxu0
    %1236 = vmatprep.mubr.f32.mxu0 0.0
    %1237 = vmatmul.mubr.f32.gmra.mrb[0].mxu0 %v1092
    %v1238 = vpop.f32.mrb[0].mxu0
    %v1239 = vadd.f32 0.0, %v1238
    %v1240 = vpop.f32.mrb[0].mxu0
    %1241 = vmatprep.mubr.f32.mxu0 0.0
    %1242 = vmatmul.mubr.f32.gmra.mrb[0].mxu0 %v1095
    %v1243 = vpop.f32.mrb[0].mxu0
    %v1244 = vadd.f32 0.0, %v1243
    %v1245 = vpop.f32.mrb[0].mxu0
    %1246 = vmatprep.mubr.f32.mxu0 0.0
    %1247 = vmatmul.mubr.f32.gmra.mrb[0].mxu0 %v1098
    %v1248 = vpop.f32.mrb[0].mxu0
    %v1249 = vadd.f32 0.0, %v1248
    %v1250 = vpop.f32.mrb[0].mxu0
    %1251 = vmatprep.mubr.f32.mxu0 0.0
    %1252 = vmatmul.mubr.f32.gmra.mrb[0].mxu0 %v1101
    %v1253 = vpop.f32.mrb[0].mxu0
    %v1254 = vadd.f32 0.0, %v1253
    %v1255 = vpop.f32.mrb[0].mxu0
    %1256 = vmatprep.mubr.f32.mxu0 0.0
    %1257 = vmatmul.mubr.f32.gmra.mrb[0].mxu0 %v1104
    %v1258 = vpop.f32.mrb[0].mxu0
    %v1259 = vadd.f32 0.0, %v1258
    %v1260 = vpop.f32.mrb[0].mxu0
    %1261 = vdwg.mxu0
    %v1262 = vsel %vm473, %v1179, -inf
    %1263 = vmax.xlane.f32.xlu0 %v1262
    %v1264 = vpop.xlane.xlu0 %1263
    %v1265 = vsel %vm473, %v1184, -inf
    %1266 = vmax.xlane.f32.xlu0 %v1265
    %v1267 = vpop.xlane.xlu0 %1266
    %v1268 = vsel %vm473, %v1189, -inf
    %1269 = vmax.xlane.f32.xlu0 %v1268
    %v1270 = vpop.xlane.xlu0 %1269
    %v1271 = vsel %vm473, %v1194, -inf
    %1272 = vmax.xlane.f32.xlu0 %v1271
    %v1273 = vpop.xlane.xlu0 %1272
    %v1274 = vsel %vm473, %v1199, -inf
    %1275 = vmax.xlane.f32.xlu0 %v1274
    %v1276 = vpop.xlane.xlu0 %1275
    %v1277 = vsel %vm473, %v1204, -inf
    %1278 = vmax.xlane.f32.xlu0 %v1277
    %v1279 = vpop.xlane.xlu0 %1278
    %v1280 = vsel %vm473, %v1209, -inf
    %1281 = vmax.xlane.f32.xlu0 %v1280
    %v1282 = vpop.xlane.xlu0 %1281
    %v1283 = vsel %vm473, %v1214, -inf
    %1284 = vmax.xlane.f32.xlu0 %v1283
    %v1285 = vpop.xlane.xlu0 %1284
    %v1286 = vsel %vm473, %v1219, -inf
    %1287 = vmax.xlane.f32.xlu0 %v1286
    %v1288 = vpop.xlane.xlu0 %1287
    %v1289 = vsel %vm473, %v1224, -inf
    %1290 = vmax.xlane.f32.xlu0 %v1289
    %v1291 = vpop.xlane.xlu0 %1290
    %v1292 = vsel %vm473, %v1229, -inf
    %1293 = vmax.xlane.f32.xlu0 %v1292
    %v1294 = vpop.xlane.xlu0 %1293
    %v1295 = vsel %vm473, %v1234, -inf
    %1296 = vmax.xlane.f32.xlu0 %v1295
    %v1297 = vpop.xlane.xlu0 %1296
    %v1298 = vsel %vm473, %v1239, -inf
    %1299 = vmax.xlane.f32.xlu0 %v1298
    %v1300 = vpop.xlane.xlu0 %1299
    %v1301 = vsel %vm473, %v1244, -inf
    %1302 = vmax.xlane.f32.xlu0 %v1301
    %v1303 = vpop.xlane.xlu0 %1302
    %v1304 = vsel %vm473, %v1249, -inf
    %1305 = vmax.xlane.f32.xlu0 %v1304
    %v1306 = vpop.xlane.xlu0 %1305
    %v1307 = vsel %vm473, %v1254, -inf
    %1308 = vmax.xlane.f32.xlu0 %v1307
    %v1309 = vpop.xlane.xlu0 %1308
    %v1310 = vsel %vm473, %v1259, -inf
    %1311 = vmax.xlane.f32.xlu0 %v1310
    %v1312 = vpop.xlane.xlu0 %1311
    %v1313 = vsub.f32 %v1179, %v1264
    %v1314 = vsub.f32 %v1184, %v1267
    %v1315 = vsub.f32 %v1189, %v1270
    %v1316 = vsub.f32 %v1194, %v1273
    %v1317 = vsub.f32 %v1199, %v1276
    %v1318 = vsub.f32 %v1204, %v1279
    %v1319 = vsub.f32 %v1209, %v1282
    %v1320 = vsub.f32 %v1214, %v1285
    %v1321 = vsub.f32 %v1219, %v1288
    %v1322 = vsub.f32 %v1224, %v1291
    %v1323 = vsub.f32 %v1229, %v1294
    %v1324 = vsub.f32 %v1234, %v1297
    %v1325 = vsub.f32 %v1239, %v1300
    %v1326 = vsub.f32 %v1244, %v1303
    %v1327 = vsub.f32 %v1249, %v1306
    %v1328 = vsub.f32 %v1254, %v1309
    %v1329 = vsub.f32 %v1259, %v1312
    %v1330 = vmul.f32 %v1313, 1.442695
    %v1331 = vpow.pop %v1330
    %v1332 = vmul.f32 %v1314, 1.442695
    %v1333 = vpow.pop %v1332
    %v1334 = vmul.f32 %v1315, 1.442695
    %v1335 = vpow.pop %v1334
    %v1336 = vmul.f32 %v1316, 1.442695
    %v1337 = vpow.pop %v1336
    %v1338 = vmul.f32 %v1317, 1.442695
    %v1339 = vpow.pop %v1338
    %v1340 = vmul.f32 %v1318, 1.442695
    %v1341 = vpow.pop %v1340
    %v1342 = vmul.f32 %v1319, 1.442695
    %v1343 = vpow.pop %v1342
    %v1344 = vmul.f32 %v1320, 1.442695
    %v1345 = vpow.pop %v1344
    %v1346 = vmul.f32 %v1321, 1.442695
    %v1347 = vpow.pop %v1346
    %v1348 = vmul.f32 %v1322, 1.442695
    %v1349 = vpow.pop %v1348
    %v1350 = vmul.f32 %v1323, 1.442695
    %v1351 = vpow.pop %v1350
    %v1352 = vmul.f32 %v1324, 1.442695
    %v1353 = vpow.pop %v1352
    %v1354 = vmul.f32 %v1325, 1.442695
    %v1355 = vpow.pop %v1354
    %v1356 = vmul.f32 %v1326, 1.442695
    %v1357 = vpow.pop %v1356
    %v1358 = vmul.f32 %v1327, 1.442695
    %v1359 = vpow.pop %v1358
    %v1360 = vmul.f32 %v1328, 1.442695
    %v1361 = vpow.pop %v1360
    %v1362 = vmul.f32 %v1329, 1.442695
    %v1363 = vpow.pop %v1362
    %v1364 = vsel %vm473, %v1331, 0.0
    %1365 = vadd.xlane.f32.xlu0 %v1364
    %v1366 = vpop.xlane.xlu0 %1365
    %v1367 = vsel %vm473, %v1333, 0.0
    %1368 = vadd.xlane.f32.xlu0 %v1367
    %v1369 = vpop.xlane.xlu0 %1368
    %v1370 = vsel %vm473, %v1335, 0.0
    %1371 = vadd.xlane.f32.xlu0 %v1370
    %v1372 = vpop.xlane.xlu0 %1371
    %v1373 = vsel %vm473, %v1337, 0.0
    %1374 = vadd.xlane.f32.xlu0 %v1373
    %v1375 = vpop.xlane.xlu0 %1374
    %v1376 = vsel %vm473, %v1339, 0.0
    %1377 = vadd.xlane.f32.xlu0 %v1376
    %v1378 = vpop.xlane.xlu0 %1377
    %v1379 = vsel %vm473, %v1341, 0.0
    %1380 = vadd.xlane.f32.xlu0 %v1379
    %v1381 = vpop.xlane.xlu0 %1380
    %v1382 = vsel %vm473, %v1343, 0.0
    %1383 = vadd.xlane.f32.xlu0 %v1382
    %v1384 = vpop.xlane.xlu0 %1383
    %v1385 = vsel %vm473, %v1345, 0.0
    %1386 = vadd.xlane.f32.xlu0 %v1385
    %v1387 = vpop.xlane.xlu0 %1386
    %v1388 = vsel %vm473, %v1347, 0.0
    %1389 = vadd.xlane.f32.xlu0 %v1388
    %v1390 = vpop.xlane.xlu0 %1389
    %v1391 = vsel %vm473, %v1349, 0.0
    %1392 = vadd.xlane.f32.xlu0 %v1391
    %v1393 = vpop.xlane.xlu0 %1392
    %v1394 = vsel %vm473, %v1351, 0.0
    %1395 = vadd.xlane.f32.xlu0 %v1394
    %v1396 = vpop.xlane.xlu0 %1395
    %v1397 = vsel %vm473, %v1353, 0.0
    %1398 = vadd.xlane.f32.xlu0 %v1397
    %v1399 = vpop.xlane.xlu0 %1398
    %v1400 = vsel %vm473, %v1355, 0.0
    %1401 = vadd.xlane.f32.xlu0 %v1400
    %v1402 = vpop.xlane.xlu0 %1401
    %v1403 = vsel %vm473, %v1357, 0.0
    %1404 = vadd.xlane.f32.xlu0 %v1403
    %v1405 = vpop.xlane.xlu0 %1404
    %v1406 = vsel %vm473, %v1359, 0.0
    %1407 = vadd.xlane.f32.xlu0 %v1406
    %v1408 = vpop.xlane.xlu0 %1407
    %v1409 = vsel %vm473, %v1361, 0.0
    %1410 = vadd.xlane.f32.xlu0 %v1409
    %v1411 = vpop.xlane.xlu0 %1410
    %v1412 = vsel %vm473, %v1363, 0.0
    %1413 = vadd.xlane.f32.xlu0 %v1412
    %v1414 = vpop.xlane.xlu0 %1413
    %v1415 = vrcp.pop %v1366
    %v1416 = vrcp.pop %v1369
    %v1417 = vrcp.pop %v1372
    %v1418 = vrcp.pop %v1375
    %v1419 = vrcp.pop %v1378
    %v1420 = vrcp.pop %v1381
    %v1421 = vrcp.pop %v1384
    %v1422 = vrcp.pop %v1387
    %v1423 = vrcp.pop %v1390
    %v1424 = vrcp.pop %v1393
    %v1425 = vrcp.pop %v1396
    %v1426 = vrcp.pop %v1399
    %v1427 = vrcp.pop %v1402
    %v1428 = vrcp.pop %v1405
    %v1429 = vrcp.pop %v1408
    %v1430 = vrcp.pop %v1411
    %v1431 = vrcp.pop %v1414
    %v1432 = vmul.f32 %v1331, %v1415
    %v1433 = vmul.f32 %v1333, %v1416
    %v1434 = vmul.f32 %v1335, %v1417
    %v1435 = vmul.f32 %v1337, %v1418
    %v1436 = vmul.f32 %v1339, %v1419
    %v1437 = vmul.f32 %v1341, %v1420
    %v1438 = vmul.f32 %v1343, %v1421
    %v1439 = vmul.f32 %v1345, %v1422
    %v1440 = vmul.f32 %v1347, %v1423
    %v1441 = vmul.f32 %v1349, %v1424
    %v1442 = vmul.f32 %v1351, %v1425
    %v1443 = vmul.f32 %v1353, %v1426
    %v1444 = vmul.f32 %v1355, %v1427
    %v1445 = vmul.f32 %v1357, %v1428
    %v1446 = vmul.f32 %v1359, %v1429
    %v1447 = vmul.f32 %v1361, %v1430
    %v1448 = vmul.f32 %v1363, %v1431
    %v1451 = vrot.slane %v139, 1
    %v1452 = vrot.slane %v145, 1
    %v1453 = vsel %vm227, %v1451, %v1452
    %v1454 = vrot.slane %v151, 1
    %v1455 = vsel %vm227, %v1452, %v1454
    %v1459 = vsel %vm473, %v1432, 0
    %v1462 = vsel %vm473, %v1433, 0
    %v1465 = vsel %vm473, %v1434, 0
    %v1468 = vsel %vm473, %v1435, 0
    %v1471 = vsel %vm473, %v1436, 0
    %v1474 = vsel %vm473, %v1437, 0
    %v1477 = vsel %vm473, %v1438, 0
    %v1480 = vsel %vm473, %v1439, 0
    %v1483 = vsel %vm473, %v1440, 0
    %v1486 = vsel %vm473, %v1441, 0
    %v1489 = vsel %vm473, %v1442, 0
    %v1492 = vsel %vm473, %v1443, 0
    %v1495 = vsel %vm473, %v1444, 0
    %v1498 = vsel %vm473, %v1445, 0
    %v1501 = vsel %vm473, %v1446, 0
    %v1504 = vsel %vm473, %v1447, 0
    %v1507 = vsel %vm473, %v1448, 0
    %v1509 = vsel %vm173, %v1454, 0
    %1511 = vmatprep.subr.mxu0 0.0
    %1512 = vmatpush1.msra.mxu0 %v1453
    %1513 = vmatprep.subr.mxu0 0.0
    %1514 = vmatpush1.msra.mxu0 %v1455
    %1515 = vmatprep.subr.mxu0 0.0
    %1516 = vmatpush1.msra.mxu0 %v1509
    %1517 = vmatprep.subr.mxu0 0.0
    %1518 = vmatpush1.msra.mxu0 0.0
    %1519 = vmatprep.subr.mxu0 0.0
    %1520 = vmatpush1.msra.mxu0 0.0
    %1521 = vmatprep.subr.mxu0 0.0
    %1522 = vmatpush1.msra.mxu0 0.0
    %1523 = vmatprep.subr.mxu0 0.0
    %1524 = vmatpush1.msra.mxu0 0.0
    %1525 = vmatprep.subr.mxu0 0.0
    %1526 = vmatpush1.msra.mxu0 0.0
    %1527 = vmatprep.subr.mxu0 0.0
    %1528 = vmatpush1.msra.mxu0 0.0
    %1529 = vmatprep.subr.mxu0 0.0
    %1530 = vmatpush1.msra.mxu0 0.0
    %1531 = vmatprep.subr.mxu0 0.0
    %1532 = vmatpush1.msra.mxu0 0.0
    %1533 = vmatprep.subr.mxu0 0.0
    %1534 = vmatpush1.msra.mxu0 0.0
    %1535 = vmatprep.subr.mxu0 0.0
    %1536 = vmatpush1.msra.mxu0 0.0
    %1537 = vmatprep.subr.mxu0 0.0
    %1538 = vmatpush1.msra.mxu0 0.0
    %1539 = vmatprep.subr.mxu0 0.0
    %1540 = vmatpush1.msra.mxu0 0.0
    %1541 = vmatprep.subr.mxu0 0.0
    %1542 = vmatpush1.msra.mxu0 0.0
    %1543 = vmatprep.subr.mxu0 0.0
    %1544 = vmatpush1.msra.mxu0 0.0
    %1545 = vmatprep.subr.mxu0 0.0
    %1546 = vmatpush1.msra.mxu0 0.0
    %1547 = vmatprep.subr.mxu0 0.0
    %1548 = vmatpush1.msra.mxu0 0.0
    %1549 = vmatprep.subr.mxu0 0.0
    %1550 = vmatpush1.msra.mxu0 0.0
    %1551 = vmatprep.subr.mxu0 0.0
    %1552 = vmatpush1.msra.mxu0 0.0
    %1553 = vmatprep.subr.mxu0 0.0
    %1554 = vmatpush1.msra.mxu0 0.0
    %1555 = vmatprep.subr.mxu0 0.0
    %1556 = vmatpush1.msra.mxu0 0.0
    %1557 = vmatprep.subr.mxu0 0.0
    %1558 = vmatpush1.msra.mxu0 0.0
    %1559 = vmatprep.subr.mxu0 0.0
    %1560 = vmatpush1.msra.mxu0 0.0
    %1561 = vmatprep.subr.mxu0 0.0
    %1562 = vmatpush1.msra.mxu0 0.0
    %1563 = vmatprep.subr.mxu0 0.0
    %1564 = vmatpush1.msra.mxu0 0.0
    %1565 = vmatprep.subr.mxu0 0.0
    %1566 = vmatpush1.msra.mxu0 0.0
    %1567 = vmatprep.subr.mxu0 0.0
    %1568 = vmatpush1.msra.mxu0 0.0
    %1569 = vmatprep.subr.mxu0 0.0
    %1570 = vmatpush1.msra.mxu0 0.0
    %1571 = vmatprep.subr.mxu0 0.0
    %1572 = vmatpush1.msra.mxu0 0.0
    %1573 = vmatprep.subr.mxu0 0.0
    %1574 = vmatpush1.msra.mxu0 0.0
    %1575 = vmatprep.mubr.f32.mxu0 0.0
    %1576 = vmatmul.mubr.f32.gmra.mrb[0].mxu0 %v1459
    %v1577 = vpop.f32.mrb[0].mxu0
    %v1578 = vadd.f32 0.0, %v1577
    %v1579 = vpop.f32.mrb[0].mxu0
    %1580 = vmatprep.mubr.f32.mxu0 0.0
    %1581 = vmatmul.mubr.f32.gmra.mrb[0].mxu0 %v1462
    %v1582 = vpop.f32.mrb[0].mxu0
    %v1583 = vadd.f32 0.0, %v1582
    %v1584 = vpop.f32.mrb[0].mxu0
    %1585 = vmatprep.mubr.f32.mxu0 0.0
    %1586 = vmatmul.mubr.f32.gmra.mrb[0].mxu0 %v1465
    %v1587 = vpop.f32.mrb[0].mxu0
    %v1588 = vadd.f32 0.0, %v1587
    %v1589 = vpop.f32.mrb[0].mxu0
    %1590 = vmatprep.mubr.f32.mxu0 0.0
    %1591 = vmatmul.mubr.f32.gmra.mrb[0].mxu0 %v1468
    %v1592 = vpop.f32.mrb[0].mxu0
    %v1593 = vadd.f32 0.0, %v1592
    %v1594 = vpop.f32.mrb[0].mxu0
    %1595 = vmatprep.mubr.f32.mxu0 0.0
    %1596 = vmatmul.mubr.f32.gmra.mrb[0].mxu0 %v1471
    %v1597 = vpop.f32.mrb[0].mxu0
    %v1598 = vadd.f32 0.0, %v1597
    %v1599 = vpop.f32.mrb[0].mxu0
    %1600 = vmatprep.mubr.f32.mxu0 0.0
    %1601 = vmatmul.mubr.f32.gmra.mrb[0].mxu0 %v1474
    %v1602 = vpop.f32.mrb[0].mxu0
    %v1603 = vadd.f32 0.0, %v1602
    %v1604 = vpop.f32.mrb[0].mxu0
    %1605 = vmatprep.mubr.f32.mxu0 0.0
    %1606 = vmatmul.mubr.f32.gmra.mrb[0].mxu0 %v1477
    %v1607 = vpop.f32.mrb[0].mxu0
    %v1608 = vadd.f32 0.0, %v1607
    %v1609 = vpop.f32.mrb[0].mxu0
    %1610 = vmatprep.mubr.f32.mxu0 0.0
    %1611 = vmatmul.mubr.f32.gmra.mrb[0].mxu0 %v1480
    %v1612 = vpop.f32.mrb[0].mxu0
    %v1613 = vadd.f32 0.0, %v1612
    %v1614 = vpop.f32.mrb[0].mxu0
    %1615 = vmatprep.mubr.f32.mxu0 0.0
    %1616 = vmatmul.mubr.f32.gmra.mrb[0].mxu0 %v1483
    %v1617 = vpop.f32.mrb[0].mxu0
    %v1618 = vadd.f32 0.0, %v1617
    %v1619 = vpop.f32.mrb[0].mxu0
    %1620 = vmatprep.mubr.f32.mxu0 0.0
    %1621 = vmatmul.mubr.f32.gmra.mrb[0].mxu0 %v1486
    %v1622 = vpop.f32.mrb[0].mxu0
    %v1623 = vadd.f32 0.0, %v1622
    %v1624 = vpop.f32.mrb[0].mxu0
    %1625 = vmatprep.mubr.f32.mxu0 0.0
    %1626 = vmatmul.mubr.f32.gmra.mrb[0].mxu0 %v1489
    %v1627 = vpop.f32.mrb[0].mxu0
    %v1628 = vadd.f32 0.0, %v1627
    %v1629 = vpop.f32.mrb[0].mxu0
    %1630 = vmatprep.mubr.f32.mxu0 0.0
    %1631 = vmatmul.mubr.f32.gmra.mrb[0].mxu0 %v1492
    %v1632 = vpop.f32.mrb[0].mxu0
    %v1633 = vadd.f32 0.0, %v1632
    %v1634 = vpop.f32.mrb[0].mxu0
    %1635 = vmatprep.mubr.f32.mxu0 0.0
    %1636 = vmatmul.mubr.f32.gmra.mrb[0].mxu0 %v1495
    %v1637 = vpop.f32.mrb[0].mxu0
    %v1638 = vadd.f32 0.0, %v1637
    %v1639 = vpop.f32.mrb[0].mxu0
    %1640 = vmatprep.mubr.f32.mxu0 0.0
    %1641 = vmatmul.mubr.f32.gmra.mrb[0].mxu0 %v1498
    %v1642 = vpop.f32.mrb[0].mxu0
    %v1643 = vadd.f32 0.0, %v1642
    %v1644 = vpop.f32.mrb[0].mxu0
    %1645 = vmatprep.mubr.f32.mxu0 0.0
    %1646 = vmatmul.mubr.f32.gmra.mrb[0].mxu0 %v1501
    %v1647 = vpop.f32.mrb[0].mxu0
    %v1648 = vadd.f32 0.0, %v1647
    %v1649 = vpop.f32.mrb[0].mxu0
    %1650 = vmatprep.mubr.f32.mxu0 0.0
    %1651 = vmatmul.mubr.f32.gmra.mrb[0].mxu0 %v1504
    %v1652 = vpop.f32.mrb[0].mxu0
    %v1653 = vadd.f32 0.0, %v1652
    %v1654 = vpop.f32.mrb[0].mxu0
    %1655 = vmatprep.mubr.f32.mxu0 0.0
    %1656 = vmatmul.mubr.f32.gmra.mrb[0].mxu0 %v1507
    %v1657 = vpop.f32.mrb[0].mxu0
    %v1658 = vadd.f32 0.0, %v1657
    %v1659 = vpop.f32.mrb[0].mxu0
    %1660 = vdwg.mxu0
    %v1661 = vmul.f32 %v1578, %v153
    %v1662 = vmul.f32 %v1583, %v154
    %v1663 = vmul.f32 %v1588, %v155
    %v1664 = vmul.f32 %v1593, %v156
    %v1665 = vmul.f32 %v1598, %v157
    %v1666 = vmul.f32 %v1603, %v158
    %v1667 = vmul.f32 %v1608, %v159
    %v1668 = vmul.f32 %v1613, %v160
    %v1669 = vmul.f32 %v1618, %v161
    %v1670 = vmul.f32 %v1623, %v162
    %v1671 = vmul.f32 %v1628, %v163
    %v1672 = vmul.f32 %v1633, %v164
    %v1673 = vmul.f32 %v1638, %v165
    %v1674 = vmul.f32 %v1643, %v166
    %v1675 = vmul.f32 %v1648, %v167
    %v1676 = vmul.f32 %v1653, %v168
    %v1677 = vmul.f32 %v1658, %v169
    %v1681 = vrot.slane %v1663, 1
    %v1682 = vrot.slane %v1664, 1
    %v1683 = vsel %vm227, %v1681, %v1682
    %v1684 = vrot.slane %v1665, 1
    %v1685 = vsel %vm227, %v1682, %v1684
    %v1689 = vadd.f32 %v1661, %v1683
    %v1690 = vadd.f32 %v1662, %v1685
    %v1691 = vadd.f32 %v1663, %v1684
    %v1694 = vrot.slane %v1665, 2
    %v1695 = vrot.slane %v1666, 2
    %v1696 = vsel %vm218, %v1694, %v1695
    %v1697 = vrot.slane %v1667, 2
    %v1698 = vsel %vm218, %v1695, %v1697
    %v1702 = vadd.f32 %v1689, %v1696
    %v1703 = vadd.f32 %v1690, %v1698
    %v1704 = vadd.f32 %v1691, %v1697
    %v1707 = vrot.slane %v1667, 3
    %v1708 = vrot.slane %v1668, 3
    %v1709 = vsel %vm209, %v1707, %v1708
    %v1710 = vrot.slane %v1669, 3
    %v1711 = vsel %vm209, %v1708, %v1710
    %v1715 = vadd.f32 %v1702, %v1709
    %v1716 = vadd.f32 %v1703, %v1711
    %v1717 = vadd.f32 %v1704, %v1710
    %v1720 = vrot.slane %v1669, 4
    %v1721 = vrot.slane %v1670, 4
    %v1722 = vsel %vm200, %v1720, %v1721
    %v1723 = vrot.slane %v1671, 4
    %v1724 = vsel %vm200, %v1721, %v1723
    %v1728 = vadd.f32 %v1715, %v1722
    %v1729 = vadd.f32 %v1716, %v1724
    %v1730 = vadd.f32 %v1717, %v1723
    %v1733 = vrot.slane %v1671, 5
    %v1734 = vrot.slane %v1672, 5
    %v1735 = vsel %vm191, %v1733, %v1734
    %v1736 = vrot.slane %v1673, 5
    %v1737 = vsel %vm191, %v1734, %v1736
    %v1741 = vadd.f32 %v1728, %v1735
    %v1742 = vadd.f32 %v1729, %v1737
    %v1743 = vadd.f32 %v1730, %v1736
    %v1746 = vrot.slane %v1673, 6
    %v1747 = vrot.slane %v1674, 6
    %v1748 = vsel %vm182, %v1746, %v1747
    %v1749 = vrot.slane %v1675, 6
    %v1750 = vsel %vm182, %v1747, %v1749
    %v1754 = vadd.f32 %v1741, %v1748
    %v1755 = vadd.f32 %v1742, %v1750
    %v1756 = vadd.f32 %v1743, %v1749
    %v1759 = vrot.slane %v1675, 7
    %v1760 = vrot.slane %v1676, 7
    %v1761 = vsel %vm173, %v1759, %v1760
    %v1762 = vrot.slane %v1677, 7
    %v1763 = vsel %vm173, %v1760, %v1762
    %v1767 = vadd.f32 %v1754, %v1761
    %v1768 = vadd.f32 %v1755, %v1763
    %v1769 = vadd.f32 %v1756, %v1762
    %v1773 = vrot.slane %v1767, 7
    %v1774 = vrot.slane %v1768, 7
    %v1775 = vsel %vm173, %v1773, %v1774
    %v1776 = vrot.slane %v1769, 7
    %v1777 = vsel %vm173, %v1774, %v1776
    %v1779 = vsel %vm173, %v973, %v1773
    %v1780 = vld [vmem:[%s3] sm:$0xff]
    %v1781 = vld [vmem:[%s3 + $0x8] sm:$0xff]
    %v1782 = vld [vmem:[%s3 + $0x10] sm:$0xff]
    %v1783 = vld [vmem:[%s3 + $0x18] sm:$0xff]
    %v1784 = vld [vmem:[%s3 + $0x20] sm:$0xff]
    %v1785 = vld [vmem:[%s3 + $0x28] sm:$0xff]
    %v1786 = vld [vmem:[%s3 + $0x30] sm:$0xff]
    %v1787 = vld [vmem:[%s3 + $0x38] sm:$0xff]
    %v1788 = vld [vmem:[%s4] sm:$0x1]
    %v1790 = vlaneseq
    %v1791 = vshrl.u32 %v1790, 7
    %v1792 = vsub.s32 0, %v1791
    %v1793 = vrot.slane %v1788, %v1792
    %v1796 = vsel %vm42, %v971, 0
    %v1799 = vsel %vm42, %v972, 0
    %v1802 = vsel %vm42, %v1779, 0
    %v1804 = vsel %vm42, %v1775, 0
    %v1806 = vsel %vm42, %v1777, 0
    %1808 = vmatprep.subr.mxu0 0.0
    %1809 = vmatpush1.msra.mxu0 %v1780
    %1810 = vmatprep.subr.mxu0 0.0
    %1811 = vmatpush1.msra.mxu0 %v1781
    %1812 = vmatprep.subr.mxu0 0.0
    %1813 = vmatpush1.msra.mxu0 %v1782
    %1814 = vmatprep.subr.mxu0 0.0
    %1815 = vmatpush1.msra.mxu0 %v1783
    %1816 = vmatprep.subr.mxu0 0.0
    %1817 = vmatpush1.msra.mxu0 %v1784
    %1818 = vmatprep.subr.mxu0 0.0
    %1819 = vmatpush1.msra.mxu0 %v1785
    %1820 = vmatprep.subr.mxu0 0.0
    %1821 = vmatpush1.msra.mxu0 %v1786
    %1822 = vmatprep.subr.mxu0 0.0
    %1823 = vmatpush1.msra.mxu0 %v1787
    %1824 = vmatprep.subr.mxu0 0.0
    %1825 = vmatpush1.msra.mxu0 0.0
    %1826 = vmatprep.subr.mxu0 0.0
    %1827 = vmatpush1.msra.mxu0 0.0
    %1828 = vmatprep.subr.mxu0 0.0
    %1829 = vmatpush1.msra.mxu0 0.0
    %1830 = vmatprep.subr.mxu0 0.0
    %1831 = vmatpush1.msra.mxu0 0.0
    %1832 = vmatprep.subr.mxu0 0.0
    %1833 = vmatpush1.msra.mxu0 0.0
    %1834 = vmatprep.subr.mxu0 0.0
    %1835 = vmatpush1.msra.mxu0 0.0
    %1836 = vmatprep.subr.mxu0 0.0
    %1837 = vmatpush1.msra.mxu0 0.0
    %1838 = vmatprep.subr.mxu0 0.0
    %1839 = vmatpush1.msra.mxu0 0.0
    %1840 = vmatprep.subr.mxu0 0.0
    %1841 = vmatpush1.msra.mxu0 0.0
    %1842 = vmatprep.subr.mxu0 0.0
    %1843 = vmatpush1.msra.mxu0 0.0
    %1844 = vmatprep.subr.mxu0 0.0
    %1845 = vmatpush1.msra.mxu0 0.0
    %1846 = vmatprep.subr.mxu0 0.0
    %1847 = vmatpush1.msra.mxu0 0.0
    %1848 = vmatprep.subr.mxu0 0.0
    %1849 = vmatpush1.msra.mxu0 0.0
    %1850 = vmatprep.subr.mxu0 0.0
    %1851 = vmatpush1.msra.mxu0 0.0
    %1852 = vmatprep.subr.mxu0 0.0
    %1853 = vmatpush1.msra.mxu0 0.0
    %1854 = vmatprep.subr.mxu0 0.0
    %1855 = vmatpush1.msra.mxu0 0.0
    %1856 = vmatprep.subr.mxu0 0.0
    %1857 = vmatpush1.msra.mxu0 0.0
    %1858 = vmatprep.subr.mxu0 0.0
    %1859 = vmatpush1.msra.mxu0 0.0
    %1860 = vmatprep.subr.mxu0 0.0
    %1861 = vmatpush1.msra.mxu0 0.0
    %1862 = vmatprep.subr.mxu0 0.0
    %1863 = vmatpush1.msra.mxu0 0.0
    %1864 = vmatprep.subr.mxu0 0.0
    %1865 = vmatpush1.msra.mxu0 0.0
    %1866 = vmatprep.subr.mxu0 0.0
    %1867 = vmatpush1.msra.mxu0 0.0
    %1868 = vmatprep.subr.mxu0 0.0
    %1869 = vmatpush1.msra.mxu0 0.0
    %1870 = vmatprep.subr.mxu0 0.0
    %1871 = vmatpush1.msra.mxu0 0.0
    %1872 = vmatprep.mubr.f32.mxu0 0.0
    %1873 = vmatmul.mubr.f32.gmra.mrb[0].mxu0 %v1796
    %v1874 = vpop.f32.mrb[0].mxu0
    %v1875 = vadd.f32 %v1793, %v1874
    %v1876 = vpop.f32.mrb[0].mxu0
    %1877 = vmatprep.mubr.f32.mxu0 0.0
    %1878 = vmatmul.mubr.f32.gmra.mrb[0].mxu0 %v1799
    %v1879 = vpop.f32.mrb[0].mxu0
    %v1880 = vadd.f32 %v1793, %v1879
    %v1881 = vpop.f32.mrb[0].mxu0
    %1882 = vmatprep.mubr.f32.mxu0 0.0
    %1883 = vmatmul.mubr.f32.gmra.mrb[0].mxu0 %v1802
    %v1884 = vpop.f32.mrb[0].mxu0
    %v1885 = vadd.f32 %v1793, %v1884
    %v1886 = vpop.f32.mrb[0].mxu0
    %1887 = vmatprep.mubr.f32.mxu0 0.0
    %1888 = vmatmul.mubr.f32.gmra.mrb[0].mxu0 %v1804
    %v1889 = vpop.f32.mrb[0].mxu0
    %v1890 = vadd.f32 %v1793, %v1889
    %v1891 = vpop.f32.mrb[0].mxu0
    %1892 = vmatprep.mubr.f32.mxu0 0.0
    %1893 = vmatmul.mubr.f32.gmra.mrb[0].mxu0 %v1806
    %v1894 = vpop.f32.mrb[0].mxu0
    %v1895 = vadd.f32 %v1793, %v1894
    %v1896 = vpop.f32.mrb[0].mxu0
    %1897 = vdwg.mxu0
    %v1901 = vrot.slane %v1885, 1
    %v1902 = vrot.slane %v1890, 1
    %v1903 = vsel %vm227, %v1901, %v1902
    %v1904 = vrot.slane %v1895, 1
    %v1905 = vsel %vm227, %v1902, %v1904
    %1906 = vrot.lane.b32.xlu0 %v1903, 64
    %v1907 = vpop.permute.xlu0 %1906
    %1908 = vrot.lane.b32.xlu0 %v1905, 64
    %v1909 = vpop.permute.xlu0 %1908
    %1910 = vrot.lane.b32.xlu0 %v1904, 64
    %v1911 = vpop.permute.xlu0 %1910
    %v1915 = vsel %vm42, %v1875, %v1907
    %v1916 = vsel %vm42, %v1880, %v1909
    %v1917 = vsel %vm42, %v1885, %v1911
    %1918 = vst [vmem:[#allocation2] sm:$0xff] %v1915
    %1919 = vst [vmem:[#allocation2 + $0x8] sm:$0xff] %v1916
    %1920 = vst [vmem:[#allocation2 + $0x10] sm:$0x1] %v1917
    // Predicated region
    $region22: #{tpu_custom_call.1} parent=1 // pred_check
      _
    $region23: #{tpu_custom_call.1} parent=1 // pred_check_branch
      %1922 = sbr.rel (0) target = $region25
    $region24: #{tpu_custom_call.1} parent=1 // pred_region
      %s1924 = ssub.s32 384, 384
      %1925 = vsyncadd [#allocation3], %s1924
      %s1926 = sshll.u32 [#allocation2], 4
      %s1927 = int_to_ptr.vmem [resolvable:$true] %s1926
      %1932 = dma.vmem_to_hbm [thread:$0]  %s1927, 384, %s5, [#allocation3], 128, 128, 8
    $region25: #{tpu_custom_call.1} parent=1 // pred_fallthru
      _
    // Predicated region
    $region26: #{tpu_custom_call.1} parent=1 // pred_check
      _
    $region27: #{tpu_custom_call.1} parent=1 // pred_check_branch
      %1934 = sbr.rel (0) target = $region29
    $region28: #{tpu_custom_call.1} parent=1 // pred_region
      %1935 = dma.done [#allocation3], 384
    $region29: #{tpu_custom_call.1} parent=1 // pred_fallthru
      _
    %1936 = vsyncpa [#allocation3], 1

</llo_original>
